<compile_context>
chip_gen: v6e
topology: v6e:2x2x1
jax: 0.10.0
libtpu: 0.0.40
codegen_flags: <defaults>
</compile_context>

<pallas_src>
import functools

import jax
import jax.numpy as jnp
import numpy as np
from jax.experimental import pallas as pl
from jax.experimental.pallas import tpu as pltpu


# ----------------------------------------------------------------------------
# Kernel: one grid step == one time tick through all D layers.
# ----------------------------------------------------------------------------
def _lstm_stack_seq_kernel(
    num_layers, hidden_dim,
    # inputs
    x_ref,      # (1, B, In)   bf16   current timestep input (streamed over T)
    c0_ref,     # (D, B, H)    f32    initial cell state   (consumed at t==0)
    h0_ref,     # (D, B, H)    bf16   initial hidden state (consumed at t==0)
    wi_ref,     # (In, D*4H)   bf16   x-path weights, all layers+gates fused
    wh1_ref,    # (D, H, 4H)   bf16   h_prev-path weights, gates fused
    wh2_ref,    # (D, H, 4H)   bf16   skip-path weights, gates fused
    b_ref,      # (D, 1, 4H)   f32    biases, gates fused
    # outputs
    hseq_ref,   # (1, B, D*H)  f32    hidden states of all layers, this step
    cfin_ref,   # (B, D*H)     f32    final cell states (written on last step)
    # scratch (carries across the T grid)
    c_sc,       # (D, B, H)    f32
    h_sc,       # (D, B, H)    bf16
):
    D, H = num_layers, hidden_dim
    t = pl.program_id(0)
    B = x_ref.shape[1]

    # ---- init recurrent carries on the first step ---------------------------
    @pl.when(t == 0)
    def _():
        c_sc[...] = c0_ref[...]
        h_sc[...] = h0_ref[...]

    # ---- hoisted, layer-invariant work (off the serial dependency chain) ----
    # x path for ALL layers in one MXU op: (B, In) x (In, D*4H) -> (B, D*4H)
    xw = jnp.dot(x_ref[0], wi_ref[...], preferred_element_type=jnp.float32)

    # h_prev path + bias for every layer (h from the previous step is known).
    base = []
    for d in range(D):
        hw = jnp.dot(h_sc[d], wh1_ref[d], preferred_element_type=jnp.float32)
        base.append(xw[:, d * 4 * H:(d + 1) * 4 * H] + hw + b_ref[d])

    # Lane mask for the fused nonlinearity (gate order f|i|o|g).
    lane = jax.lax.broadcasted_iota(jnp.int32, (B, 4 * H), 1)
    is_sig = lane < 3 * H

    # ---- serial chain: one small matmul + one tanh pass per layer -----------
    skip = h_sc[D - 1]                      # d == 0 uses h_{D}^{t-1} (top-down)
    c_list, h_list = [], []
    for d in range(D):                      # static unroll (D small)
        z = base[d] + jnp.dot(skip, wh2_ref[d],
                              preferred_element_type=jnp.float32)   # (B, 4H)
        # sigmoid(z) = 0.5*(tanh(z/2)+1): one EUP pass over the fused vector.
        th = jnp.tanh(jnp.where(is_sig, 0.5 * z, z))
        acts = jnp.where(is_sig, 0.5 * th + 0.5, th)

        f = acts[:, 0 * H:1 * H]
        i = acts[:, 1 * H:2 * H]
        o = acts[:, 2 * H:3 * H]
        g = acts[:, 3 * H:4 * H]

        c_new = f * c_sc[d] + i * g
        h_new = o * jnp.tanh(c_new)

        c_sc[d] = c_new
        skip = h_new.astype(jnp.bfloat16)   # skip for layer d+1 / next step
        h_sc[d] = skip

        c_list.append(c_new)
        h_list.append(h_new)

    # Lane-dense per-step output: single (B, D*H) store instead of D H-wide ones.
    hseq_ref[0] = jnp.concatenate(h_list, axis=-1)

    @pl.when(t == pl.num_programs(0) - 1)
    def _():
        cfin_ref[...] = jnp.concatenate(c_list, axis=-1)


# ----------------------------------------------------------------------------
# Wrapper
# ----------------------------------------------------------------------------
def fuse_params(params):
    """Concatenate gates (f, i, o, c) along the output axis and cast to bf16."""
    wi = jnp.concatenate(
        [params["wfi"], params["wii"], params["woi"], params["wci"]], axis=-1)
    D, In, H4 = wi.shape
    wi_all = jnp.transpose(wi, (1, 0, 2)).reshape(In, D * H4).astype(jnp.bfloat16)
    wh1 = jnp.concatenate(
        [params["wfh1"], params["wih1"], params["woh1"], params["wch1"]],
        axis=-1).astype(jnp.bfloat16)
    wh2 = jnp.concatenate(
        [params["wfh2"], params["wih2"], params["woh2"], params["wch2"]],
        axis=-1).astype(jnp.bfloat16)
    b = jnp.concatenate(
        [params["bf"], params["bi"], params["bo"], params["bc"]],
        axis=-1).astype(jnp.float32)
    return {"wi_all": wi_all, "wh1": wh1, "wh2": wh2, "b": b}


def multilayer_lstm_forward_seq(xs, c0, h0, fused):
    """Run T ticks of the D-layer stack in one kernel.

    xs: (T, B, In) f32; c0/h0: (D, B, H) f32.
    Returns (c_final (D,B,H), h_final (D,B,H), h_seq (T,D,B,H)).
    """
    T, B, In = xs.shape
    D, _, H = c0.shape
    H4 = 4 * H

    xs_b = xs.astype(jnp.bfloat16)
    h0_b = h0.astype(jnp.bfloat16)

    flops_step = (2 * B * In * (D * H4)          # fused x-path matmul
                  + 2 * 2 * D * B * H * H4       # h_prev-path + skip-path
                  + 10 * D * B * H)              # elementwise combine
    transcendentals = T * D * B * (H4 + H)       # tanh(z'), tanh(c)
    bytes_accessed = (
        xs_b.size * 2 + h0_b.size * 2 + c0.size * 4
        + fused["wi_all"].size * 2 + fused["wh1"].size * 2
        + fused["wh2"].size * 2 + fused["b"].size * 4
        + T * B * D * H * 4 + B * D * H * 4)

    hseq, cfin = pl.pallas_call(
        functools.partial(_lstm_stack_seq_kernel, D, H),
        out_shape=(
            jax.ShapeDtypeStruct((T, B, D * H), jnp.float32),   # per-step h slab
            jax.ShapeDtypeStruct((B, D * H), jnp.float32),      # final c slab
        ),
        grid_spec=pltpu.PrefetchScalarGridSpec(
            num_scalar_prefetch=0,
            grid=(T,),
            in_specs=[
                # streamed per step (default double-buffered pipeline)
                pl.BlockSpec((1, B, In), lambda t: (t, 0, 0)),
                # VMEM-resident across the whole grid (constant index maps)
                pl.BlockSpec((D, B, H), lambda t: (0, 0, 0)),
                pl.BlockSpec((D, B, H), lambda t: (0, 0, 0)),
                pl.BlockSpec((In, D * H4), lambda t: (0, 0)),
                pl.BlockSpec((D, H, H4), lambda t: (0, 0, 0)),
                pl.BlockSpec((D, H, H4), lambda t: (0, 0, 0)),
                pl.BlockSpec((D, 1, H4), lambda t: (0, 0, 0)),
            ],
            out_specs=(
                pl.BlockSpec((1, B, D * H), lambda t: (t, 0, 0)),
                pl.BlockSpec((B, D * H), lambda t: (0, 0)),
            ),
            scratch_shapes=[
                pltpu.VMEM((D, B, H), jnp.float32),    # c carry
                pltpu.VMEM((D, B, H), jnp.bfloat16),   # h carry (matmul input)
            ],
        ),
        compiler_params=pltpu.CompilerParams(
            dimension_semantics=("arbitrary",),        # serial time recurrence
            vmem_limit_bytes=32 * 1024 * 1024),
        cost_estimate=pl.CostEstimate(
            flops=int(T * flops_step),
            transcendentals=int(transcendentals),
            bytes_accessed=int(bytes_accessed)),
    )(xs_b, c0, h0_b, fused["wi_all"], fused["wh1"], fused["wh2"], fused["b"])

    # Unpack lane-dense slabs back to module layout.
    h_seq = jnp.transpose(hseq.reshape(T, B, D, H), (0, 2, 1, 3))   # (T,D,B,H)
    c_final = jnp.transpose(cfin.reshape(B, D, H), (1, 0, 2))       # (D,B,H)
    h_final = h_seq[-1]
    return c_final, h_final, h_seq


# ----------------------------------------------------------------------------
# Init + references
# ----------------------------------------------------------------------------
def init_params(key, input_dim, hidden_dim, num_layers):
    """nn.Linear-style init (uniform +/- 1/sqrt(fan_in)); weights stored (in, out).
    Biases exist only on the input-path Linears, so their fan_in is input_dim."""
    names = ["wfi", "wfh1", "wfh2", "bf",
             "wii", "wih1", "wih2", "bi",
             "woi", "woh1", "woh2", "bo",
             "wci", "wch1", "wch2", "bc"]
    shapes = {
        "wfi": (num_layers, input_dim, hidden_dim),
        "wfh1": (num_layers, hidden_dim, hidden_dim),
        "wfh2": (num_layers, hidden_dim, hidden_dim),
        "bf": (num_layers, 1, hidden_dim),
    }
    for g in ("i", "o", "c"):
        shapes[f"w{g}i"] = shapes["wfi"]
        shapes[f"w{g}h1"] = shapes["wfh1"]
        shapes[f"w{g}h2"] = shapes["wfh2"]
        shapes[f"b{g}"] = shapes["bf"]

    params = {}
    keys = jax.random.split(key, len(names))
    for k, name in zip(keys, names):
        shape = shapes[name]
        if name.startswith("b") or name.endswith("i"):
            fan_in = input_dim
        else:
            fan_in = hidden_dim
        bound = 1.0 / np.sqrt(fan_in)
        params[name] = jax.random.uniform(
            k, shape, dtype=jnp.float32, minval=-bound, maxval=bound)
    return params


def reference_forward_f32_seq(xs, c0, h0, params):
    """Pure-JAX f32 reference matching the PyTorch module exactly, over T steps."""
    D = c0.shape[0]
    c, h = c0, h0
    hs = []
    for t in range(xs.shape[0]):
        x = xs[t]
        skip = h[D - 1]
        c_new, h_new = [], []
        for d in range(D):
            gate = lambda wi, wh1, wh2, b: (
                x @ params[wi][d] + h[d] @ params[wh1][d]
                + skip @ params[wh2][d] + params[b][d])
            f = jax.nn.sigmoid(gate("wfi", "wfh1", "wfh2", "bf"))
            i = jax.nn.sigmoid(gate("wii", "wih1", "wih2", "bi"))
            o = jax.nn.sigmoid(gate("woi", "woh1", "woh2", "bo"))
            g = jnp.tanh(gate("wci", "wch1", "wch2", "bc"))
            c_new.append(f * c[d] + i * g)
            h_new.append(o * jnp.tanh(c_new[-1]))
            skip = h_new[-1]
        c, h = jnp.stack(c_new), jnp.stack(h_new)
        hs.append(h)
    return c, h, jnp.stack(hs)


def reference_forward_bf16_seq(xs, c0, h0, fused):
    """Pure-JAX reference with the SAME bf16 matmul precision as the kernel."""
    D, _, H = c0.shape
    c = c0
    h_b = h0.astype(jnp.bfloat16)
    hs = []
    for t in range(xs.shape[0]):
        x_b = xs[t].astype(jnp.bfloat16)
        xw = jnp.dot(x_b, fused["wi_all"], preferred_element_type=jnp.float32)
        skip = h_b[D - 1]
        c_new, h_new_f32, h_new_b = [], [], []
        for d in range(D):
            z = (xw[:, d * 4 * H:(d + 1) * 4 * H]
                 + jnp.dot(h_b[d], fused["wh1"][d],
                           preferred_element_type=jnp.float32)
                 + jnp.dot(skip, fused["wh2"][d],
                           preferred_element_type=jnp.float32)
                 + fused["b"][d])
            f = jax.nn.sigmoid(z[:, 0 * H:1 * H])
            i = jax.nn.sigmoid(z[:, 1 * H:2 * H])
            o = jax.nn.sigmoid(z[:, 2 * H:3 * H])
            g = jnp.tanh(z[:, 3 * H:4 * H])
            cc = f * c[d] + i * g
            hh = o * jnp.tanh(cc)
            c_new.append(cc)
            h_new_f32.append(hh)
            skip = hh.astype(jnp.bfloat16)
            h_new_b.append(skip)
        c = jnp.stack(c_new)
        h_b = jnp.stack(h_new_b)
        hs.append(jnp.stack(h_new_f32))
    return c, jnp.stack(hs)


# ----------------------------------------------------------------------------
# Main
# ----------------------------------------------------------------------------
if __name__ == "__main__":
    batch = 8
    input_dim = 16
    hidden_dim = 32          # 4H = 128 -> fused gates fill one full vreg width
    num_layers = 3
    seq_len = 8

    root = jax.random.PRNGKey(0)
    k_par, k_x, k_c, k_h = jax.random.split(root, 4)

    params = init_params(k_par, input_dim, hidden_dim, num_layers)
    fused = fuse_params(params)
    xs = jax.random.normal(k_x, (seq_len, batch, input_dim), dtype=jnp.float32)
    c0 = jax.random.normal(k_c, (num_layers, batch, hidden_dim), dtype=jnp.float32)
    h0 = jax.random.normal(k_h, (num_layers, batch, hidden_dim), dtype=jnp.float32)

    fwd = jax.jit(multilayer_lstm_forward_seq)
    c_fin, h_fin, h_seq = fwd(xs, c0, h0, fused)
    jax.block_until_ready((c_fin, h_fin, h_seq))

    # Tight check against a reference with matching bf16 matmul precision.
    c_bf, hs_bf = reference_forward_bf16_seq(xs, c0, h0, fused)
    np.testing.assert_allclose(np.asarray(h_seq), np.asarray(hs_bf), rtol=5e-3, atol=5e-3)
    np.testing.assert_allclose(np.asarray(c_fin), np.asarray(c_bf), rtol=5e-3, atol=5e-3)
    np.testing.assert_allclose(np.asarray(h_fin), np.asarray(hs_bf[-1]), rtol=5e-3, atol=5e-3)

    # Loose check against full-f32 module semantics (bf16 weight quantization
    # accumulates over the 8-step recurrence).
    c_ref, h_ref, hs_ref = reference_forward_f32_seq(xs, c0, h0, params)
    np.testing.assert_allclose(np.asarray(c_fin), np.asarray(c_ref), rtol=2e-1, atol=2e-1)
    np.testing.assert_allclose(np.asarray(h_fin), np.asarray(h_ref), rtol=2e-1, atol=2e-1)

    print("KERNEL_OK")
</pallas_src>

<mosaic_0001>
module attributes {stable_mosaic.version = 11 : i64} {
  func.func @_lstm_stack_seq_kernel(%arg0: i32, %arg1: memref<1x8x16xbf16, #tpu.memory_space<vmem>>, %arg2: memref<3x8x32xf32, #tpu.memory_space<vmem>>, %arg3: memref<3x8x32xbf16, #tpu.memory_space<vmem>>, %arg4: memref<16x384xbf16, #tpu.memory_space<vmem>>, %arg5: memref<3x32x128xbf16, #tpu.memory_space<vmem>>, %arg6: memref<3x32x128xbf16, #tpu.memory_space<vmem>>, %arg7: memref<3x1x128xf32, #tpu.memory_space<vmem>>, %arg8: memref<1x8x96xf32, #tpu.memory_space<vmem>>, %arg9: memref<8x96xf32, #tpu.memory_space<vmem>>, %arg10: memref<3x8x32xf32, #tpu.memory_space<vmem>>, %arg11: memref<3x8x32xbf16, #tpu.memory_space<vmem>>) attributes {dimension_semantics = [#tpu.dimension_semantics<arbitrary>], iteration_bounds = array<i64: 8>, scalar_prefetch = 0 : i64, scratch_operands = 2 : i64, tpu.core_type = #tpu.core_type<tc>, window_params = [{transform_indices = @transform_0, window_bounds = array<i64: 1, 8, 16>}, {pipeline_mode = #tpu.pipeline_mode<synchronous>, transform_indices = @transform_1, window_bounds = array<i64: 3, 8, 32>}, {pipeline_mode = #tpu.pipeline_mode<synchronous>, transform_indices = @transform_2, window_bounds = array<i64: 3, 8, 32>}, {pipeline_mode = #tpu.pipeline_mode<synchronous>, transform_indices = @transform_3, window_bounds = array<i64: 16, 384>}, {pipeline_mode = #tpu.pipeline_mode<synchronous>, transform_indices = @transform_4, window_bounds = array<i64: 3, 32, 128>}, {pipeline_mode = #tpu.pipeline_mode<synchronous>, transform_indices = @transform_5, window_bounds = array<i64: 3, 32, 128>}, {pipeline_mode = #tpu.pipeline_mode<synchronous>, transform_indices = @transform_6, window_bounds = array<i64: 3, 1, 128>}, {transform_indices = @transform_7, window_bounds = array<i64: 1, 8, 96>}, {pipeline_mode = #tpu.pipeline_mode<synchronous>, transform_indices = @transform_8, window_bounds = array<i64: 8, 96>}]} {
    %c0_i32 = arith.constant 0 : i32
    %0 = arith.cmpi eq, %arg0, %c0_i32 : i32
    %1 = arith.extui %0 : i1 to i32
    %c0_i32_0 = arith.constant 0 : i32
    %2 = arith.cmpi ne, %1, %c0_i32_0 : i32
    scf.if %2 {
      %c0_88 = arith.constant 0 : index
      %c0_89 = arith.constant 0 : index
      %c0_90 = arith.constant 0 : index
      %145 = vector.load %arg2[%c0_88, %c0_89, %c0_90] : memref<3x8x32xf32, #tpu.memory_space<vmem>>, vector<3x8x32xf32>
      %c0_91 = arith.constant 0 : index
      %c0_92 = arith.constant 0 : index
      %c0_93 = arith.constant 0 : index
      %146 = vector.load %arg10[%c0_91, %c0_92, %c0_93] : memref<3x8x32xf32, #tpu.memory_space<vmem>>, vector<3x8x32xf32>
      tpu.vector_store %arg10[%c0_91, %c0_92, %c0_93], %145 {strides = array<i32>} : memref<3x8x32xf32, #tpu.memory_space<vmem>>, vector<3x8x32xf32>,
      %c0_94 = arith.constant 0 : index
      %c0_95 = arith.constant 0 : index
      %c0_96 = arith.constant 0 : index
      %147 = vector.load %arg3[%c0_94, %c0_95, %c0_96] : memref<3x8x32xbf16, #tpu.memory_space<vmem>>, vector<3x8x32xbf16>
      %c0_97 = arith.constant 0 : index
      %c0_98 = arith.constant 0 : index
      %c0_99 = arith.constant 0 : index
      %148 = vector.load %arg11[%c0_97, %c0_98, %c0_99] : memref<3x8x32xbf16, #tpu.memory_space<vmem>>, vector<3x8x32xbf16>
      tpu.vector_store %arg11[%c0_97, %c0_98, %c0_99], %147 {strides = array<i32>} : memref<3x8x32xbf16, #tpu.memory_space<vmem>>, vector<3x8x32xbf16>,
    } else {
    }
    %c0 = arith.constant 0 : index
    %c0_1 = arith.constant 0 : index
    %c0_2 = arith.constant 0 : index
    %3 = vector.load %arg1[%c0, %c0_1, %c0_2] : memref<1x8x16xbf16, #tpu.memory_space<vmem>>, vector<1x8x16xbf16>
    %4 = vector.shape_cast %3 : vector<1x8x16xbf16> to vector<8x16xbf16>
    %c0_3 = arith.constant 0 : index
    %c0_4 = arith.constant 0 : index
    %5 = vector.load %arg4[%c0_3, %c0_4] : memref<16x384xbf16, #tpu.memory_space<vmem>>, vector<16x384xbf16>
    %cst = arith.constant dense<0.000000e+00> : vector<8x384xf32>
    %6 = tpu.matmul %4, %5, %cst {dimension_numbers = #tpu.dot_dimension_numbers<[1], [0], [0], [1], [0, 0, 1, 1], [], []>} : vector<8x16xbf16>, vector<16x384xbf16>, vector<8x384xf32> -> vector<8x384xf32>
    %c0_5 = arith.constant 0 : index
    %c0_6 = arith.constant 0 : index
    %c0_7 = arith.constant 0 : index
    %7 = vector.load %arg11[%c0_5, %c0_6, %c0_7] : memref<3x8x32xbf16, #tpu.memory_space<vmem>>, vector<1x8x32xbf16>
    %8 = vector.shape_cast %7 : vector<1x8x32xbf16> to vector<8x32xbf16>
    %c0_8 = arith.constant 0 : index
    %c0_9 = arith.constant 0 : index
    %c0_10 = arith.constant 0 : index
    %9 = vector.load %arg5[%c0_8, %c0_9, %c0_10] : memref<3x32x128xbf16, #tpu.memory_space<vmem>>, vector<1x32x128xbf16>
    %10 = vector.shape_cast %9 : vector<1x32x128xbf16> to vector<32x128xbf16>
    %cst_11 = arith.constant dense<0.000000e+00> : vector<8x128xf32>
    %11 = tpu.matmul %8, %10, %cst_11 {dimension_numbers = #tpu.dot_dimension_numbers<[1], [0], [0], [1], [0, 0, 1, 1], [], []>} : vector<8x32xbf16>, vector<32x128xbf16>, vector<8x128xf32> -> vector<8x128xf32>
    %12 = vector.extract_strided_slice %6 {offsets = [0, 0], sizes = [8, 128], strides = [1, 1]} : vector<8x384xf32> to vector<8x128xf32>
    %13 = arith.addf %12, %11 : vector<8x128xf32>
    %c0_12 = arith.constant 0 : index
    %c0_13 = arith.constant 0 : index
    %c0_14 = arith.constant 0 : index
    %14 = vector.load %arg7[%c0_12, %c0_13, %c0_14] : memref<3x1x128xf32, #tpu.memory_space<vmem>>, vector<1x1x128xf32>
    %15 = vector.shape_cast %14 : vector<1x1x128xf32> to vector<1x128xf32>
    %16 = vector.broadcast %15 : vector<1x128xf32> to vector<8x128xf32>
    %17 = arith.addf %13, %16 : vector<8x128xf32>
    %c1 = arith.constant 1 : index
    %c0_15 = arith.constant 0 : index
    %c0_16 = arith.constant 0 : index
    %18 = vector.load %arg11[%c1, %c0_15, %c0_16] : memref<3x8x32xbf16, #tpu.memory_space<vmem>>, vector<1x8x32xbf16>
    %19 = vector.shape_cast %18 : vector<1x8x32xbf16> to vector<8x32xbf16>
    %c1_17 = arith.constant 1 : index
    %c0_18 = arith.constant 0 : index
    %c0_19 = arith.constant 0 : index
    %20 = vector.load %arg5[%c1_17, %c0_18, %c0_19] : memref<3x32x128xbf16, #tpu.memory_space<vmem>>, vector<1x32x128xbf16>
    %21 = vector.shape_cast %20 : vector<1x32x128xbf16> to vector<32x128xbf16>
    %cst_20 = arith.constant dense<0.000000e+00> : vector<8x128xf32>
    %22 = tpu.matmul %19, %21, %cst_20 {dimension_numbers = #tpu.dot_dimension_numbers<[1], [0], [0], [1], [0, 0, 1, 1], [], []>} : vector<8x32xbf16>, vector<32x128xbf16>, vector<8x128xf32> -> vector<8x128xf32>
    %23 = vector.extract_strided_slice %6 {offsets = [0, 128], sizes = [8, 128], strides = [1, 1]} : vector<8x384xf32> to vector<8x128xf32>
    %24 = arith.addf %23, %22 : vector<8x128xf32>
    %c1_21 = arith.constant 1 : index
    %c0_22 = arith.constant 0 : index
    %c0_23 = arith.constant 0 : index
    %25 = vector.load %arg7[%c1_21, %c0_22, %c0_23] : memref<3x1x128xf32, #tpu.memory_space<vmem>>, vector<1x1x128xf32>
    %26 = vector.shape_cast %25 : vector<1x1x128xf32> to vector<1x128xf32>
    %27 = vector.broadcast %26 : vector<1x128xf32> to vector<8x128xf32>
    %28 = arith.addf %24, %27 : vector<8x128xf32>
    %c2 = arith.constant 2 : index
    %c0_24 = arith.constant 0 : index
    %c0_25 = arith.constant 0 : index
    %29 = vector.load %arg11[%c2, %c0_24, %c0_25] : memref<3x8x32xbf16, #tpu.memory_space<vmem>>, vector<1x8x32xbf16>
    %30 = vector.shape_cast %29 : vector<1x8x32xbf16> to vector<8x32xbf16>
    %c2_26 = arith.constant 2 : index
    %c0_27 = arith.constant 0 : index
    %c0_28 = arith.constant 0 : index
    %31 = vector.load %arg5[%c2_26, %c0_27, %c0_28] : memref<3x32x128xbf16, #tpu.memory_space<vmem>>, vector<1x32x128xbf16>
    %32 = vector.shape_cast %31 : vector<1x32x128xbf16> to vector<32x128xbf16>
    %cst_29 = arith.constant dense<0.000000e+00> : vector<8x128xf32>
    %33 = tpu.matmul %30, %32, %cst_29 {dimension_numbers = #tpu.dot_dimension_numbers<[1], [0], [0], [1], [0, 0, 1, 1], [], []>} : vector<8x32xbf16>, vector<32x128xbf16>, vector<8x128xf32> -> vector<8x128xf32>
    %34 = vector.extract_strided_slice %6 {offsets = [0, 256], sizes = [8, 128], strides = [1, 1]} : vector<8x384xf32> to vector<8x128xf32>
    %35 = arith.addf %34, %33 : vector<8x128xf32>
    %c2_30 = arith.constant 2 : index
    %c0_31 = arith.constant 0 : index
    %c0_32 = arith.constant 0 : index
    %36 = vector.load %arg7[%c2_30, %c0_31, %c0_32] : memref<3x1x128xf32, #tpu.memory_space<vmem>>, vector<1x1x128xf32>
    %37 = vector.shape_cast %36 : vector<1x1x128xf32> to vector<1x128xf32>
    %38 = vector.broadcast %37 : vector<1x128xf32> to vector<8x128xf32>
    %39 = arith.addf %35, %38 : vector<8x128xf32>
    %40 = tpu.iota {dimensions = array<i32: 1>} : vector<8x128xi32>
    %c96_i32 = arith.constant 96 : i32
    %41 = vector.broadcast %c96_i32 : i32 to vector<8x128xi32>
    %42 = arith.cmpi slt, %40, %41 : vector<8x128xi32>
    %c2_33 = arith.constant 2 : index
    %c0_34 = arith.constant 0 : index
    %c0_35 = arith.constant 0 : index
    %43 = vector.load %arg11[%c2_33, %c0_34, %c0_35] : memref<3x8x32xbf16, #tpu.memory_space<vmem>>, vector<1x8x32xbf16>
    %44 = vector.shape_cast %43 : vector<1x8x32xbf16> to vector<8x32xbf16>
    %c0_36 = arith.constant 0 : index
    %c0_37 = arith.constant 0 : index
    %c0_38 = arith.constant 0 : index
    %45 = vector.load %arg6[%c0_36, %c0_37, %c0_38] : memref<3x32x128xbf16, #tpu.memory_space<vmem>>, vector<1x32x128xbf16>
    %46 = vector.shape_cast %45 : vector<1x32x128xbf16> to vector<32x128xbf16>
    %cst_39 = arith.constant dense<0.000000e+00> : vector<8x128xf32>
    %47 = tpu.matmul %44, %46, %cst_39 {dimension_numbers = #tpu.dot_dimension_numbers<[1], [0], [0], [1], [0, 0, 1, 1], [], []>} : vector<8x32xbf16>, vector<32x128xbf16>, vector<8x128xf32> -> vector<8x128xf32>
    %48 = arith.addf %17, %47 : vector<8x128xf32>
    %cst_40 = arith.constant 5.000000e-01 : f32
    %49 = vector.broadcast %cst_40 : f32 to vector<8x128xf32>
    %50 = arith.mulf %49, %48 : vector<8x128xf32>
    %51 = arith.select %42, %50, %48 : vector<8x128xi1>, vector<8x128xf32>
    %52 = math.tanh %51 : vector<8x128xf32>
    %cst_41 = arith.constant 5.000000e-01 : f32
    %53 = vector.broadcast %cst_41 : f32 to vector<8x128xf32>
    %54 = arith.mulf %53, %52 : vector<8x128xf32>
    %cst_42 = arith.constant 5.000000e-01 : f32
    %55 = vector.broadcast %cst_42 : f32 to vector<8x128xf32>
    %56 = arith.addf %54, %55 : vector<8x128xf32>
    %57 = arith.select %42, %56, %52 : vector<8x128xi1>, vector<8x128xf32>
    %58 = vector.extract_strided_slice %57 {offsets = [0, 0], sizes = [8, 32], strides = [1, 1]} : vector<8x128xf32> to vector<8x32xf32>
    %59 = vector.extract_strided_slice %57 {offsets = [0, 32], sizes = [8, 32], strides = [1, 1]} : vector<8x128xf32> to vector<8x32xf32>
    %60 = vector.extract_strided_slice %57 {offsets = [0, 64], sizes = [8, 32], strides = [1, 1]} : vector<8x128xf32> to vector<8x32xf32>
    %61 = vector.extract_strided_slice %57 {offsets = [0, 96], sizes = [8, 32], strides = [1, 1]} : vector<8x128xf32> to vector<8x32xf32>
    %c0_43 = arith.constant 0 : index
    %c0_44 = arith.constant 0 : index
    %c0_45 = arith.constant 0 : index
    %62 = vector.load %arg10[%c0_43, %c0_44, %c0_45] : memref<3x8x32xf32, #tpu.memory_space<vmem>>, vector<1x8x32xf32>
    %63 = vector.shape_cast %62 : vector<1x8x32xf32> to vector<8x32xf32>
    %64 = arith.mulf %58, %63 : vector<8x32xf32>
    %65 = arith.mulf %59, %61 : vector<8x32xf32>
    %66 = arith.addf %64, %65 : vector<8x32xf32>
    %67 = math.tanh %66 : vector<8x32xf32>
    %68 = arith.mulf %60, %67 : vector<8x32xf32>
    %c0_46 = arith.constant 0 : index
    %c0_47 = arith.constant 0 : index
    %c0_48 = arith.constant 0 : index
    %69 = vector.load %arg10[%c0_46, %c0_47, %c0_48] : memref<3x8x32xf32, #tpu.memory_space<vmem>>, vector<1x8x32xf32>
    %70 = vector.shape_cast %69 : vector<1x8x32xf32> to vector<8x32xf32>
    %71 = vector.shape_cast %66 : vector<8x32xf32> to vector<1x8x32xf32>
    tpu.vector_store %arg10[%c0_46, %c0_47, %c0_48], %71 {strides = array<i32>} : memref<3x8x32xf32, #tpu.memory_space<vmem>>, vector<1x8x32xf32>,
    %72 = arith.truncf %68 : vector<8x32xf32> to vector<8x32xbf16>
    %c0_49 = arith.constant 0 : index
    %c0_50 = arith.constant 0 : index
    %c0_51 = arith.constant 0 : index
    %73 = vector.load %arg11[%c0_49, %c0_50, %c0_51] : memref<3x8x32xbf16, #tpu.memory_space<vmem>>, vector<1x8x32xbf16>
    %74 = vector.shape_cast %73 : vector<1x8x32xbf16> to vector<8x32xbf16>
    %75 = vector.shape_cast %72 : vector<8x32xbf16> to vector<1x8x32xbf16>
    tpu.vector_store %arg11[%c0_49, %c0_50, %c0_51], %75 {strides = array<i32>} : memref<3x8x32xbf16, #tpu.memory_space<vmem>>, vector<1x8x32xbf16>,
    %c1_52 = arith.constant 1 : index
    %c0_53 = arith.constant 0 : index
    %c0_54 = arith.constant 0 : index
    %76 = vector.load %arg6[%c1_52, %c0_53, %c0_54] : memref<3x32x128xbf16, #tpu.memory_space<vmem>>, vector<1x32x128xbf16>
    %77 = vector.shape_cast %76 : vector<1x32x128xbf16> to vector<32x128xbf16>
    %cst_55 = arith.constant dense<0.000000e+00> : vector<8x128xf32>
    %78 = tpu.matmul %72, %77, %cst_55 {dimension_numbers = #tpu.dot_dimension_numbers<[1], [0], [0], [1], [0, 0, 1, 1], [], []>} : vector<8x32xbf16>, vector<32x128xbf16>, vector<8x128xf32> -> vector<8x128xf32>
    %79 = arith.addf %28, %78 : vector<8x128xf32>
    %cst_56 = arith.constant 5.000000e-01 : f32
    %80 = vector.broadcast %cst_56 : f32 to vector<8x128xf32>
    %81 = arith.mulf %80, %79 : vector<8x128xf32>
    %82 = arith.select %42, %81, %79 : vector<8x128xi1>, vector<8x128xf32>
    %83 = math.tanh %82 : vector<8x128xf32>
    %cst_57 = arith.constant 5.000000e-01 : f32
    %84 = vector.broadcast %cst_57 : f32 to vector<8x128xf32>
    %85 = arith.mulf %84, %83 : vector<8x128xf32>
    %cst_58 = arith.constant 5.000000e-01 : f32
    %86 = vector.broadcast %cst_58 : f32 to vector<8x128xf32>
    %87 = arith.addf %85, %86 : vector<8x128xf32>
    %88 = arith.select %42, %87, %83 : vector<8x128xi1>, vector<8x128xf32>
    %89 = vector.extract_strided_slice %88 {offsets = [0, 0], sizes = [8, 32], strides = [1, 1]} : vector<8x128xf32> to vector<8x32xf32>
    %90 = vector.extract_strided_slice %88 {offsets = [0, 32], sizes = [8, 32], strides = [1, 1]} : vector<8x128xf32> to vector<8x32xf32>
    %91 = vector.extract_strided_slice %88 {offsets = [0, 64], sizes = [8, 32], strides = [1, 1]} : vector<8x128xf32> to vector<8x32xf32>
    %92 = vector.extract_strided_slice %88 {offsets = [0, 96], sizes = [8, 32], strides = [1, 1]} : vector<8x128xf32> to vector<8x32xf32>
    %c1_59 = arith.constant 1 : index
    %c0_60 = arith.constant 0 : index
    %c0_61 = arith.constant 0 : index
    %93 = vector.load %arg10[%c1_59, %c0_60, %c0_61] : memref<3x8x32xf32, #tpu.memory_space<vmem>>, vector<1x8x32xf32>
    %94 = vector.shape_cast %93 : vector<1x8x32xf32> to vector<8x32xf32>
    %95 = arith.mulf %89, %94 : vector<8x32xf32>
    %96 = arith.mulf %90, %92 : vector<8x32xf32>
    %97 = arith.addf %95, %96 : vector<8x32xf32>
    %98 = math.tanh %97 : vector<8x32xf32>
    %99 = arith.mulf %91, %98 : vector<8x32xf32>
    %c1_62 = arith.constant 1 : index
    %c0_63 = arith.constant 0 : index
    %c0_64 = arith.constant 0 : index
    %100 = vector.load %arg10[%c1_62, %c0_63, %c0_64] : memref<3x8x32xf32, #tpu.memory_space<vmem>>, vector<1x8x32xf32>
    %101 = vector.shape_cast %100 : vector<1x8x32xf32> to vector<8x32xf32>
    %102 = vector.shape_cast %97 : vector<8x32xf32> to vector<1x8x32xf32>
    tpu.vector_store %arg10[%c1_62, %c0_63, %c0_64], %102 {strides = array<i32>} : memref<3x8x32xf32, #tpu.memory_space<vmem>>, vector<1x8x32xf32>,
    %103 = arith.truncf %99 : vector<8x32xf32> to vector<8x32xbf16>
    %c1_65 = arith.constant 1 : index
    %c0_66 = arith.constant 0 : index
    %c0_67 = arith.constant 0 : index
    %104 = vector.load %arg11[%c1_65, %c0_66, %c0_67] : memref<3x8x32xbf16, #tpu.memory_space<vmem>>, vector<1x8x32xbf16>
    %105 = vector.shape_cast %104 : vector<1x8x32xbf16> to vector<8x32xbf16>
    %106 = vector.shape_cast %103 : vector<8x32xbf16> to vector<1x8x32xbf16>
    tpu.vector_store %arg11[%c1_65, %c0_66, %c0_67], %106 {strides = array<i32>} : memref<3x8x32xbf16, #tpu.memory_space<vmem>>, vector<1x8x32xbf16>,
    %c2_68 = arith.constant 2 : index
    %c0_69 = arith.constant 0 : index
    %c0_70 = arith.constant 0 : index
    %107 = vector.load %arg6[%c2_68, %c0_69, %c0_70] : memref<3x32x128xbf16, #tpu.memory_space<vmem>>, vector<1x32x128xbf16>
    %108 = vector.shape_cast %107 : vector<1x32x128xbf16> to vector<32x128xbf16>
    %cst_71 = arith.constant dense<0.000000e+00> : vector<8x128xf32>
    %109 = tpu.matmul %103, %108, %cst_71 {dimension_numbers = #tpu.dot_dimension_numbers<[1], [0], [0], [1], [0, 0, 1, 1], [], []>} : vector<8x32xbf16>, vector<32x128xbf16>, vector<8x128xf32> -> vector<8x128xf32>
    %110 = arith.addf %39, %109 : vector<8x128xf32>
    %cst_72 = arith.constant 5.000000e-01 : f32
    %111 = vector.broadcast %cst_72 : f32 to vector<8x128xf32>
    %112 = arith.mulf %111, %110 : vector<8x128xf32>
    %113 = arith.select %42, %112, %110 : vector<8x128xi1>, vector<8x128xf32>
    %114 = math.tanh %113 : vector<8x128xf32>
    %cst_73 = arith.constant 5.000000e-01 : f32
    %115 = vector.broadcast %cst_73 : f32 to vector<8x128xf32>
    %116 = arith.mulf %115, %114 : vector<8x128xf32>
    %cst_74 = arith.constant 5.000000e-01 : f32
    %117 = vector.broadcast %cst_74 : f32 to vector<8x128xf32>
    %118 = arith.addf %116, %117 : vector<8x128xf32>
    %119 = arith.select %42, %118, %114 : vector<8x128xi1>, vector<8x128xf32>
    %120 = vector.extract_strided_slice %119 {offsets = [0, 0], sizes = [8, 32], strides = [1, 1]} : vector<8x128xf32> to vector<8x32xf32>
    %121 = vector.extract_strided_slice %119 {offsets = [0, 32], sizes = [8, 32], strides = [1, 1]} : vector<8x128xf32> to vector<8x32xf32>
    %122 = vector.extract_strided_slice %119 {offsets = [0, 64], sizes = [8, 32], strides = [1, 1]} : vector<8x128xf32> to vector<8x32xf32>
    %123 = vector.extract_strided_slice %119 {offsets = [0, 96], sizes = [8, 32], strides = [1, 1]} : vector<8x128xf32> to vector<8x32xf32>
    %c2_75 = arith.constant 2 : index
    %c0_76 = arith.constant 0 : index
    %c0_77 = arith.constant 0 : index
    %124 = vector.load %arg10[%c2_75, %c0_76, %c0_77] : memref<3x8x32xf32, #tpu.memory_space<vmem>>, vector<1x8x32xf32>
    %125 = vector.shape_cast %124 : vector<1x8x32xf32> to vector<8x32xf32>
    %126 = arith.mulf %120, %125 : vector<8x32xf32>
    %127 = arith.mulf %121, %123 : vector<8x32xf32>
    %128 = arith.addf %126, %127 : vector<8x32xf32>
    %129 = math.tanh %128 : vector<8x32xf32>
    %130 = arith.mulf %122, %129 : vector<8x32xf32>
    %c2_78 = arith.constant 2 : index
    %c0_79 = arith.constant 0 : index
    %c0_80 = arith.constant 0 : index
    %131 = vector.load %arg10[%c2_78, %c0_79, %c0_80] : memref<3x8x32xf32, #tpu.memory_space<vmem>>, vector<1x8x32xf32>
    %132 = vector.shape_cast %131 : vector<1x8x32xf32> to vector<8x32xf32>
    %133 = vector.shape_cast %128 : vector<8x32xf32> to vector<1x8x32xf32>
    tpu.vector_store %arg10[%c2_78, %c0_79, %c0_80], %133 {strides = array<i32>} : memref<3x8x32xf32, #tpu.memory_space<vmem>>, vector<1x8x32xf32>,
    %134 = arith.truncf %130 : vector<8x32xf32> to vector<8x32xbf16>
    %c2_81 = arith.constant 2 : index
    %c0_82 = arith.constant 0 : index
    %c0_83 = arith.constant 0 : index
    %135 = vector.load %arg11[%c2_81, %c0_82, %c0_83] : memref<3x8x32xbf16, #tpu.memory_space<vmem>>, vector<1x8x32xbf16>
    %136 = vector.shape_cast %135 : vector<1x8x32xbf16> to vector<8x32xbf16>
    %137 = vector.shape_cast %134 : vector<8x32xbf16> to vector<1x8x32xbf16>
    tpu.vector_store %arg11[%c2_81, %c0_82, %c0_83], %137 {strides = array<i32>} : memref<3x8x32xbf16, #tpu.memory_space<vmem>>, vector<1x8x32xbf16>,
    %138 = tpu.concatenate %68, %99, %130 in 1 : vector<8x32xf32>, vector<8x32xf32>, vector<8x32xf32> -> vector<8x96xf32>
    %c0_84 = arith.constant 0 : index
    %c0_85 = arith.constant 0 : index
    %c0_86 = arith.constant 0 : index
    %139 = vector.load %arg8[%c0_84, %c0_85, %c0_86] : memref<1x8x96xf32, #tpu.memory_space<vmem>>, vector<1x8x96xf32>
    %140 = vector.shape_cast %139 : vector<1x8x96xf32> to vector<8x96xf32>
    %141 = vector.shape_cast %138 : vector<8x96xf32> to vector<1x8x96xf32>
    tpu.vector_store %arg8[%c0_84, %c0_85, %c0_86], %141 {strides = array<i32>} : memref<1x8x96xf32, #tpu.memory_space<vmem>>, vector<1x8x96xf32>,
    %c7_i32 = arith.constant 7 : i32
    %142 = arith.cmpi eq, %arg0, %c7_i32 : i32
    %143 = arith.extui %142 : i1 to i32
    %c0_i32_87 = arith.constant 0 : i32
    %144 = arith.cmpi ne, %143, %c0_i32_87 : i32
    scf.if %144 {
      %145 = tpu.concatenate %66, %97, %128 in 1 : vector<8x32xf32>, vector<8x32xf32>, vector<8x32xf32> -> vector<8x96xf32>
      %c0_88 = arith.constant 0 : index
      %c0_89 = arith.constant 0 : index
      %146 = vector.load %arg9[%c0_88, %c0_89] : memref<8x96xf32, #tpu.memory_space<vmem>>, vector<8x96xf32>
      tpu.vector_store %arg9[%c0_88, %c0_89], %145 {strides = array<i32>} : memref<8x96xf32, #tpu.memory_space<vmem>>, vector<8x96xf32>,
    } else {
    }
    return
  }
  func.func @transform_0(%arg0: i32) -> (i32, i32, i32) {
    %c0_i32 = arith.constant 0 : i32
    %c0_i32_0 = arith.constant 0 : i32
    %c0_i32_1 = arith.constant 0 : i32
    return %arg0, %c0_i32, %c0_i32_0 : i32, i32, i32
  }
  func.func @transform_1(%arg0: i32) -> (i32, i32, i32) {
    %c0_i32 = arith.constant 0 : i32
    %c0_i32_0 = arith.constant 0 : i32
    %c0_i32_1 = arith.constant 0 : i32
    %c0_i32_2 = arith.constant 0 : i32
    return %c0_i32, %c0_i32_0, %c0_i32_1 : i32, i32, i32
  }
  func.func @transform_2(%arg0: i32) -> (i32, i32, i32) {
    %c0_i32 = arith.constant 0 : i32
    %c0_i32_0 = arith.constant 0 : i32
    %c0_i32_1 = arith.constant 0 : i32
    %c0_i32_2 = arith.constant 0 : i32
    return %c0_i32, %c0_i32_0, %c0_i32_1 : i32, i32, i32
  }
  func.func @transform_3(%arg0: i32) -> (i32, i32) {
    %c0_i32 = arith.constant 0 : i32
    %c0_i32_0 = arith.constant 0 : i32
    %c0_i32_1 = arith.constant 0 : i32
    return %c0_i32, %c0_i32_0 : i32, i32
  }
  func.func @transform_4(%arg0: i32) -> (i32, i32, i32) {
    %c0_i32 = arith.constant 0 : i32
    %c0_i32_0 = arith.constant 0 : i32
    %c0_i32_1 = arith.constant 0 : i32
    %c0_i32_2 = arith.constant 0 : i32
    return %c0_i32, %c0_i32_0, %c0_i32_1 : i32, i32, i32
  }
  func.func @transform_5(%arg0: i32) -> (i32, i32, i32) {
    %c0_i32 = arith.constant 0 : i32
    %c0_i32_0 = arith.constant 0 : i32
    %c0_i32_1 = arith.constant 0 : i32
    %c0_i32_2 = arith.constant 0 : i32
    return %c0_i32, %c0_i32_0, %c0_i32_1 : i32, i32, i32
  }
  func.func @transform_6(%arg0: i32) -> (i32, i32, i32) {
    %c0_i32 = arith.constant 0 : i32
    %c0_i32_0 = arith.constant 0 : i32
    %c0_i32_1 = arith.constant 0 : i32
    %c0_i32_2 = arith.constant 0 : i32
    return %c0_i32, %c0_i32_0, %c0_i32_1 : i32, i32, i32
  }
  func.func @transform_7(%arg0: i32) -> (i32, i32, i32) {
    %c0_i32 = arith.constant 0 : i32
    %c0_i32_0 = arith.constant 0 : i32
    %c0_i32_1 = arith.constant 0 : i32
    return %arg0, %c0_i32, %c0_i32_0 : i32, i32, i32
  }
  func.func @transform_8(%arg0: i32) -> (i32, i32) {
    %c0_i32 = arith.constant 0 : i32
    %c0_i32_0 = arith.constant 0 : i32
    %c0_i32_1 = arith.constant 0 : i32
    return %c0_i32, %c0_i32_0 : i32, i32
  }
}

</mosaic_0001>

<llo_original>
// kernel: multilayer_lstm_forward_seq.1
$region0: #{multilayer_lstm_forward_seq.1}
  #allocation0 [shape = 'u32[]', space=smem, size = 0x4, offset = 0x4, fixed_abs, tag = 'smem constant byte address 0x4 - core index']
  #allocation1 [shape = 'u32[144,128]{1,0:T(1,128)}', space=vmem, size = 0x12000, scoped, tag = 'internal scratch']
  #allocation2 [shape = 'f32[3,8,32]{2,1,0:T(8,128)}', space=vmem, size = 0x3000, scoped, tag = 'scratch operand']
  #allocation3 [shape = 'bf16[3,8,32]{2,1,0:T(8,128)(2,1)}', space=vmem, size = 0x1800, scoped, tag = 'scratch operand']
  %s0 = inlined_call_operand.vmem [shape: bf16[8,8,16], index: 0, kind: input, shape index: {}]
  %s1 = inlined_call_operand.hbm [shape: f32[3,8,32], index: 1, kind: input, shape index: {}]
  %s2 = inlined_call_operand.vmem [shape: bf16[3,8,32], index: 2, kind: input, shape index: {}]
  %s3 = inlined_call_operand.hbm [shape: bf16[16,384], index: 3, kind: input, shape index: {}]
  %s4 = inlined_call_operand.vmem [shape: bf16[3,32,128], index: 4, kind: input, shape index: {}]
  %s5 = inlined_call_operand.vmem [shape: bf16[3,32,128], index: 5, kind: input, shape index: {}]
  %s6 = inlined_call_operand.vmem [shape: f32[3,1,128], index: 6, kind: input, shape index: {}]
  %s7 = inlined_call_operand.vmem [shape: f32[8,8,96], index: 7, kind: output, shape index: {0}]
  %s8 = inlined_call_operand.vmem [shape: f32[8,96], index: 8, kind: output, shape index: {1}]
  %9 = xla_tuple %s7, %s8
  %s10 = sld [smem:[#allocation0]]
  $region85: #{multilayer_lstm_forward_seq.1} parent=0
    _
  %s12 = ssub.s32 1, %s10
  %s13 = scalar_select 0, %s12, %s10
  $region1: #{multilayer_lstm_forward_seq.1} parent=0
    #allocation4 [shape = 'u8[12288]{0}', space=vmem, size = 0x3000, scoped, tag = 'input window, operand 1, single buffered']
    #allocation5 [shape = 's32[2]{0}', space=sflag, size = 0x8, scoped, tag = 'scoped memory for multilayer_lstm_forward_seq.1']
    #allocation6 [shape = 'u8[12288]{0}', space=vmem, size = 0x3000, scoped, tag = 'input window, operand 3, single buffered']
    #allocation7 [shape = 's32[1]{0}', space=sflag, size = 0x4, scoped, tag = 'scoped memory for multilayer_lstm_forward_seq.1']
    %14 = vsyncpa [#allocation5], 0
    %15 = vsyncpa [#allocation7], 0
    loop: start=0, step=1, limit=10
    $region2: #{multilayer_lstm_forward_seq.1} parent=1 // loop_pre_header
      _
    $region3: #{multilayer_lstm_forward_seq.1} parent=1 // loop_header
      %s17 = sphi 0, %s21
      %p18 = scmp.ge.s32.totalorder %s17, 10
      %s27 = sphi 0, %s29
      %s30 = sphi 0, %s27
      %s31 = sphi 0, %s30
      %s47 = sphi 0, %s31
      %s51 = sphi 0, %s51
      %s53 = sphi 0, %s51
      %s54 = sphi 0, %s53
      %s68 = sphi 0, %s54
      %s72 = sphi 0, %s72
      %s74 = sphi 0, %s72
      %s75 = sphi 0, %s74
      %s89 = sphi 0, %s75
      %s93 = sphi 0, %s93
      %s95 = sphi 0, %s93
      %s96 = sphi 0, %s95
      %s110 = sphi 0, %s96
      %s114 = sphi 0, %s114
      %s116 = sphi 0, %s114
      %s117 = sphi 0, %s116
      %s131 = sphi 0, %s117
      %s135 = sphi 0, %s135
      %s137 = sphi 0, %s135
      %s138 = sphi 0, %s137
      %s152 = sphi 0, %s138
      %s156 = sphi 0, %s156
      %s158 = sphi 0, %s156
      %s159 = sphi 0, %s158
      %s173 = sphi 0, %s159
      %s179 = sphi 0, %s181
      %s182 = sphi 0, %s179
      %s183 = sphi 0, %s182
      %s199 = sphi 0, %s183
      %s203 = sphi 0, %s203
      %s205 = sphi 0, %s203
      %s206 = sphi 0, %s205
      %s220 = sphi 0, %s206
    $region4: #{multilayer_lstm_forward_seq.1} parent=1 // loop_header_branch
      %20 = sbr.rel (%p18) target = $region8
    $region5: #{multilayer_lstm_forward_seq.1} parent=1 // loop_body
      %s22 = ssub.s32 %s17, 1
      %s23 = ssub.s32 %s17, 2
      %s24 = sadd.s32 %s17, 1
      %s25 = ssub.s32 %s17, %s24
      %p26 = scmp.eq.s32.totalorder %s25, 0
      %s28 = sadd.s32 %s27, 1
      %s29 = scalar_select %p26, %s27, %s28
      %p32 = pneg %p26
      %p33 = scmp.eq.s32.totalorder %s17, 7
      %p34 = por %p32, %p33
      %p35 = scmp.ne.s32.totalorder %s27, %s30
      %p36 = scmp.eq.s32.totalorder %s17, 0
      %p37 = por %p35, %p36
      %p38 = scmp.ne.s32.totalorder %s27, %s30
      %p39 = scmp.eq.s32.totalorder %s22, 7
      %p40 = por %p38, %p39
      %p41 = scmp.ne.s32.totalorder %s30, %s31
      %p42 = scmp.eq.s32.totalorder %s22, 0
      %p43 = por %p41, %p42
      %p44 = scmp.ne.s32.totalorder %s30, %s31
      %p45 = scmp.eq.s32.totalorder %s23, 7
      %p46 = por %p44, %p45
      %p48 = scmp.ne.s32.totalorder %s31, %s47
      %p49 = scmp.eq.s32.totalorder %s23, 0
      %p50 = por %p48, %p49
      %s52 = sadd.s32 %s51, 1
      %p55 = scmp.eq.s32.totalorder %s17, 7
      %p56 = scmp.ne.s32.totalorder %s51, %s53
      %p57 = scmp.eq.s32.totalorder %s17, 0
      %p58 = por %p56, %p57
      %p59 = scmp.ne.s32.totalorder %s51, %s53
      %p60 = scmp.eq.s32.totalorder %s22, 7
      %p61 = por %p59, %p60
      %p62 = scmp.ne.s32.totalorder %s53, %s54
      %p63 = scmp.eq.s32.totalorder %s22, 0
      %p64 = por %p62, %p63
      %p65 = scmp.ne.s32.totalorder %s53, %s54
      %p66 = scmp.eq.s32.totalorder %s23, 7
      %p67 = por %p65, %p66
      %p69 = scmp.ne.s32.totalorder %s54, %s68
      %p70 = scmp.eq.s32.totalorder %s23, 0
      %p71 = por %p69, %p70
      %s73 = sadd.s32 %s72, 1
      %p76 = scmp.eq.s32.totalorder %s17, 7
      %p77 = scmp.ne.s32.totalorder %s72, %s74
      %p78 = scmp.eq.s32.totalorder %s17, 0
      %p79 = por %p77, %p78
      %p80 = scmp.ne.s32.totalorder %s72, %s74
      %p81 = scmp.eq.s32.totalorder %s22, 7
      %p82 = por %p80, %p81
      %p83 = scmp.ne.s32.totalorder %s74, %s75
      %p84 = scmp.eq.s32.totalorder %s22, 0
      %p85 = por %p83, %p84
      %p86 = scmp.ne.s32.totalorder %s74, %s75
      %p87 = scmp.eq.s32.totalorder %s23, 7
      %p88 = por %p86, %p87
      %p90 = scmp.ne.s32.totalorder %s75, %s89
      %p91 = scmp.eq.s32.totalorder %s23, 0
      %p92 = por %p90, %p91
      %s94 = sadd.s32 %s93, 1
      %p97 = scmp.eq.s32.totalorder %s17, 7
      %p98 = scmp.ne.s32.totalorder %s93, %s95
      %p99 = scmp.eq.s32.totalorder %s17, 0
      %p100 = por %p98, %p99
      %p101 = scmp.ne.s32.totalorder %s93, %s95
      %p102 = scmp.eq.s32.totalorder %s22, 7
      %p103 = por %p101, %p102
      %p104 = scmp.ne.s32.totalorder %s95, %s96
      %p105 = scmp.eq.s32.totalorder %s22, 0
      %p106 = por %p104, %p105
      %p107 = scmp.ne.s32.totalorder %s95, %s96
      %p108 = scmp.eq.s32.totalorder %s23, 7
      %p109 = por %p107, %p108
      %p111 = scmp.ne.s32.totalorder %s96, %s110
      %p112 = scmp.eq.s32.totalorder %s23, 0
      %p113 = por %p111, %p112
      %s115 = sadd.s32 %s114, 1
      %p118 = scmp.eq.s32.totalorder %s17, 7
      %p119 = scmp.ne.s32.totalorder %s114, %s116
      %p120 = scmp.eq.s32.totalorder %s17, 0
      %p121 = por %p119, %p120
      %p122 = scmp.ne.s32.totalorder %s114, %s116
      %p123 = scmp.eq.s32.totalorder %s22, 7
      %p124 = por %p122, %p123
      %p125 = scmp.ne.s32.totalorder %s116, %s117
      %p126 = scmp.eq.s32.totalorder %s22, 0
      %p127 = por %p125, %p126
      %p128 = scmp.ne.s32.totalorder %s116, %s117
      %p129 = scmp.eq.s32.totalorder %s23, 7
      %p130 = por %p128, %p129
      %p132 = scmp.ne.s32.totalorder %s117, %s131
      %p133 = scmp.eq.s32.totalorder %s23, 0
      %p134 = por %p132, %p133
      %s136 = sadd.s32 %s135, 1
      %p139 = scmp.eq.s32.totalorder %s17, 7
      %p140 = scmp.ne.s32.totalorder %s135, %s137
      %p141 = scmp.eq.s32.totalorder %s17, 0
      %p142 = por %p140, %p141
      %p143 = scmp.ne.s32.totalorder %s135, %s137
      %p144 = scmp.eq.s32.totalorder %s22, 7
      %p145 = por %p143, %p144
      %p146 = scmp.ne.s32.totalorder %s137, %s138
      %p147 = scmp.eq.s32.totalorder %s22, 0
      %p148 = por %p146, %p147
      %p149 = scmp.ne.s32.totalorder %s137, %s138
      %p150 = scmp.eq.s32.totalorder %s23, 7
      %p151 = por %p149, %p150
      %p153 = scmp.ne.s32.totalorder %s138, %s152
      %p154 = scmp.eq.s32.totalorder %s23, 0
      %p155 = por %p153, %p154
      %s157 = sadd.s32 %s156, 1
      %p160 = scmp.eq.s32.totalorder %s17, 7
      %p161 = scmp.ne.s32.totalorder %s156, %s158
      %p162 = scmp.eq.s32.totalorder %s17, 0
      %p163 = por %p161, %p162
      %p164 = scmp.ne.s32.totalorder %s156, %s158
      %p165 = scmp.eq.s32.totalorder %s22, 7
      %p166 = por %p164, %p165
      %p167 = scmp.ne.s32.totalorder %s158, %s159
      %p168 = scmp.eq.s32.totalorder %s22, 0
      %p169 = por %p167, %p168
      %p170 = scmp.ne.s32.totalorder %s158, %s159
      %p171 = scmp.eq.s32.totalorder %s23, 7
      %p172 = por %p170, %p171
      %p174 = scmp.ne.s32.totalorder %s159, %s173
      %p175 = scmp.eq.s32.totalorder %s23, 0
      %p176 = por %p174, %p175
      %s177 = ssub.s32 %s17, %s24
      %p178 = scmp.eq.s32.totalorder %s177, 0
      %s180 = sadd.s32 %s179, 1
      %s181 = scalar_select %p178, %s179, %s180
      %p184 = pneg %p178
      %p185 = scmp.eq.s32.totalorder %s17, 7
      %p186 = por %p184, %p185
      %p187 = scmp.ne.s32.totalorder %s179, %s182
      %p188 = scmp.eq.s32.totalorder %s17, 0
      %p189 = por %p187, %p188
      %p190 = scmp.ne.s32.totalorder %s179, %s182
      %p191 = scmp.eq.s32.totalorder %s22, 7
      %p192 = por %p190, %p191
      %p193 = scmp.ne.s32.totalorder %s182, %s183
      %p194 = scmp.eq.s32.totalorder %s22, 0
      %p195 = por %p193, %p194
      %p196 = scmp.ne.s32.totalorder %s182, %s183
      %p197 = scmp.eq.s32.totalorder %s23, 7
      %p198 = por %p196, %p197
      %p200 = scmp.ne.s32.totalorder %s183, %s199
      %p201 = scmp.eq.s32.totalorder %s23, 0
      %p202 = por %p200, %p201
      %s204 = sadd.s32 %s203, 1
      %p207 = scmp.eq.s32.totalorder %s17, 7
      %p208 = scmp.ne.s32.totalorder %s203, %s205
      %p209 = scmp.eq.s32.totalorder %s17, 0
      %p210 = por %p208, %p209
      %p211 = scmp.ne.s32.totalorder %s203, %s205
      %p212 = scmp.eq.s32.totalorder %s22, 7
      %p213 = por %p211, %p212
      %p214 = scmp.ne.s32.totalorder %s205, %s206
      %p215 = scmp.eq.s32.totalorder %s22, 0
      %p216 = por %p214, %p215
      %p217 = scmp.ne.s32.totalorder %s205, %s206
      %p218 = scmp.eq.s32.totalorder %s23, 7
      %p219 = por %p217, %p218
      %p221 = scmp.ne.s32.totalorder %s206, %s220
      %p222 = scmp.eq.s32.totalorder %s23, 0
      %p223 = por %p221, %p222
      %p224 = scmp.le.s32.totalorder 1, %s17
      %p225 = scmp.lt.s32.totalorder %s17, 9
      %p226 = pnand %p224, %p225
      %p227 = pneg %p226
      // Predicated region
      $region9: #{multilayer_lstm_forward_seq.1} parent=5 // pred_check
        _
      $region10: #{multilayer_lstm_forward_seq.1} parent=5 // pred_check_branch
        %229 = sbr.rel (%p226) target = $region12
      $region11: #{multilayer_lstm_forward_seq.1} parent=5 // pred_region
        %s230 = ssub.s32 %s17, 1
        // Predicated region
        $region13: #{multilayer_lstm_forward_seq.1} parent=11 // pred_check
          %p231 = pneg %p64
        $region14: #{multilayer_lstm_forward_seq.1} parent=11 // pred_check_branch
          %233 = sbr.rel (%p231) target = $region16
        $region15: #{multilayer_lstm_forward_seq.1} parent=11 // pred_region
          %s235 = ssub.s32 384, 384
          %236 = vsyncadd [#allocation5], %s235
          %s237 = sshll.u32 [#allocation4], 4
          %s238 = int_to_ptr.vmem [resolvable:$true] %s237
          %243 = dma.hbm_to_vmem [thread:$0]  %s1, 384, %s238, [#allocation5], 128, 128, 8
        $region16: #{multilayer_lstm_forward_seq.1} parent=11 // pred_fallthru
          _
        // Predicated region
        $region17: #{multilayer_lstm_forward_seq.1} parent=11 // pred_check
          %p244 = pneg %p85
        $region18: #{multilayer_lstm_forward_seq.1} parent=11 // pred_check_branch
          %246 = sbr.rel (%p244) target = $region20
        $region19: #{multilayer_lstm_forward_seq.1} parent=11 // pred_region
          _
        $region20: #{multilayer_lstm_forward_seq.1} parent=11 // pred_fallthru
          _
        // Predicated region
        $region21: #{multilayer_lstm_forward_seq.1} parent=11 // pred_check
          %p247 = pneg %p106
        $region22: #{multilayer_lstm_forward_seq.1} parent=11 // pred_check_branch
          %249 = sbr.rel (%p247) target = $region24
        $region23: #{multilayer_lstm_forward_seq.1} parent=11 // pred_region
          %s251 = ssub.s32 384, 384
          %252 = vsyncadd [#allocation7], %s251
          %s253 = sshll.u32 [#allocation6], 4
          %s254 = int_to_ptr.vmem [resolvable:$true] %s253
          %259 = dma.hbm_to_vmem [thread:$0]  %s3, 384, %s254, [#allocation7], 192, 192, 12
        $region24: #{multilayer_lstm_forward_seq.1} parent=11 // pred_fallthru
          _
        // Predicated region
        $region25: #{multilayer_lstm_forward_seq.1} parent=11 // pred_check
          %p260 = pneg %p127
        $region26: #{multilayer_lstm_forward_seq.1} parent=11 // pred_check_branch
          %262 = sbr.rel (%p260) target = $region28
        $region27: #{multilayer_lstm_forward_seq.1} parent=11 // pred_region
          _
        $region28: #{multilayer_lstm_forward_seq.1} parent=11 // pred_fallthru
          _
        // Predicated region
        $region29: #{multilayer_lstm_forward_seq.1} parent=11 // pred_check
          %p263 = pneg %p148
        $region30: #{multilayer_lstm_forward_seq.1} parent=11 // pred_check_branch
          %265 = sbr.rel (%p263) target = $region32
        $region31: #{multilayer_lstm_forward_seq.1} parent=11 // pred_region
          _
        $region32: #{multilayer_lstm_forward_seq.1} parent=11 // pred_fallthru
          _
        // Predicated region
        $region33: #{multilayer_lstm_forward_seq.1} parent=11 // pred_check
          %p266 = pneg %p169
        $region34: #{multilayer_lstm_forward_seq.1} parent=11 // pred_check_branch
          %268 = sbr.rel (%p266) target = $region36
        $region35: #{multilayer_lstm_forward_seq.1} parent=11 // pred_region
          _
        $region36: #{multilayer_lstm_forward_seq.1} parent=11 // pred_fallthru
          _
      $region12: #{multilayer_lstm_forward_seq.1} parent=5 // pred_fallthru
        _
      %p269 = scmp.lt.s32.totalorder %s17, 8
      // Predicated region
      $region37: #{multilayer_lstm_forward_seq.1} parent=5 // pred_check
        %p270 = pneg %p269
      $region38: #{multilayer_lstm_forward_seq.1} parent=5 // pred_check_branch
        %272 = sbr.rel (%p270) target = $region40
      $region39: #{multilayer_lstm_forward_seq.1} parent=5 // pred_region
        // Predicated region
        $region41: #{multilayer_lstm_forward_seq.1} parent=39 // pred_check
          %p273 = pneg %p37
        $region42: #{multilayer_lstm_forward_seq.1} parent=39 // pred_check_branch
          %275 = sbr.rel (%p273) target = $region44
        $region43: #{multilayer_lstm_forward_seq.1} parent=39 // pred_region
          %p276 = scmp.lt.s32.totalorder %s17, 7
          %s277 = scalar_select %p276, %s17, 7
          %s278 = smul.addr %s277, 4
          %s279 = scalar_lea.vmem %s0, %s278
        $region44: #{multilayer_lstm_forward_seq.1} parent=39 // pred_fallthru
          _
      $region40: #{multilayer_lstm_forward_seq.1} parent=5 // pred_fallthru
        _
      %p280 = scmp.le.s32.totalorder 1, %s17
      %p281 = scmp.lt.s32.totalorder %s17, 9
      %p282 = pnand %p280, %p281
      %p283 = pneg %p282
      // Predicated region
      $region45: #{multilayer_lstm_forward_seq.1} parent=5 // pred_check
        _
      $region46: #{multilayer_lstm_forward_seq.1} parent=5 // pred_check_branch
        %285 = sbr.rel (%p282) target = $region48
      $region47: #{multilayer_lstm_forward_seq.1} parent=5 // pred_region
        %s286 = ssub.s32 %s17, 1
        // Predicated region
        $region49: #{multilayer_lstm_forward_seq.1} parent=47 // pred_check
          %p287 = pneg %p64
        $region50: #{multilayer_lstm_forward_seq.1} parent=47 // pred_check_branch
          %289 = sbr.rel (%p287) target = $region52
        $region51: #{multilayer_lstm_forward_seq.1} parent=47 // pred_region
          %290 = dma.done [#allocation5], 384
        $region52: #{multilayer_lstm_forward_seq.1} parent=47 // pred_fallthru
          _
        // Predicated region
        $region53: #{multilayer_lstm_forward_seq.1} parent=47 // pred_check
          %p291 = pneg %p106
        $region54: #{multilayer_lstm_forward_seq.1} parent=47 // pred_check_branch
          %293 = sbr.rel (%p291) target = $region56
        $region55: #{multilayer_lstm_forward_seq.1} parent=47 // pred_region
          %294 = dma.done [#allocation7], 384
        $region56: #{multilayer_lstm_forward_seq.1} parent=47 // pred_fallthru
          _
        %p295 = scmp.lt.s32.totalorder %s22, 7
        %s296 = scalar_select %p295, %s22, 7
        %s297 = smul.addr %s296, 4
        %s298 = scalar_lea.vmem %s0, %s297
        %p299 = pneg %p43
        %p300 = pneg %p40
        %p301 = pneg %p64
        %p302 = pneg %p61
        %p303 = pneg %p85
        %p304 = pneg %p82
        %p305 = pneg %p106
        %p306 = pneg %p103
        %p307 = pneg %p127
        %p308 = pneg %p124
        %p309 = pneg %p148
        %p310 = pneg %p145
        %p311 = pneg %p169
        %p312 = pneg %p166
        %p313 = pneg %p195
        %p314 = pneg %p192
        %p315 = scmp.lt.s32.totalorder %s22, 7
        %s316 = scalar_select %p315, %s22, 7
        %s317 = smul.addr %s316, 8
        %s318 = scalar_lea.vmem %s7, %s317
        %p319 = pneg %p216
        %p320 = pneg %p213
        %p321 = scmp.lt.s32.totalorder %s22, 7
        %s322 = scalar_select %p321, %s22, 7
        %s323 = smul.addr %s322, 4
        %s324 = scalar_lea.vmem %s0, %s323
        %p325 = scmp.lt.s32.totalorder %s22, 7
        %s326 = scalar_select %p325, %s22, 7
        %s327 = smul.addr %s326, 8
        %s328 = scalar_lea.vmem %s7, %s327
        %p330 = scmp.eq.s32.totalorder %s22, 0
        // Predicated region
        $region57: #{multilayer_lstm_forward_seq.1} parent=47 // pred_check
          %p331 = pneg %p330
        $region58: #{multilayer_lstm_forward_seq.1} parent=47 // pred_check_branch
          %333 = sbr.rel (%p331) target = $region60
        $region59: #{multilayer_lstm_forward_seq.1} parent=47 // pred_region
          %v334 = vld [vmem:[#allocation4] sm:$0xff]
          %v335 = vld [vmem:[#allocation4 + $0x8] sm:$0xff]
          %v336 = vld [vmem:[#allocation4 + $0x10] sm:$0xff]
          %vm337 = vcmask 261120
          %338 = vst.msk [vmem:[#allocation2] sm:$0xff] %vm337, %v334
          %339 = vst.msk [vmem:[#allocation2 + $0x8] sm:$0xff] %vm337, %v335
          %340 = vst.msk [vmem:[#allocation2 + $0x10] sm:$0xff] %vm337, %v336
          %v341 = vld [vmem:[%s2] sm:$0xf]
          %v342 = vld [vmem:[%s2 + $0x4] sm:$0xf]
          %v343 = vld [vmem:[%s2 + $0x8] sm:$0xf]
          %vm344 = vcmask 257024
          %345 = vst.msk [vmem:[#allocation3] sm:$0xf] %vm344, %v341
          %346 = vst.msk [vmem:[#allocation3 + $0x4] sm:$0xf] %vm344, %v342
          %347 = vst.msk [vmem:[#allocation3 + $0x8] sm:$0xf] %vm344, %v343
        $region60: #{multilayer_lstm_forward_seq.1} parent=47 // pred_fallthru
          _
        %v348 = vld [vmem:[%s324] sm:$0xf]
        %v349 = vld [vmem:[#allocation6] sm:$0xff]
        %v350 = vld [vmem:[#allocation6 + $0x8] sm:$0xf]
        %v351 = vld [vmem:[#allocation6 + $0xc] sm:$0xff]
        %v352 = vld [vmem:[#allocation6 + $0x14] sm:$0xf]
        %v357 = vunpack.c.l.b16 %v349
        %v358 = vunpack.c.h.b16 %v349
        %v359 = vunpack.c.l.b16 %v350
        %v360 = vunpack.c.l.b16 %v351
        %v361 = vunpack.c.h.b16 %v351
        %v362 = vunpack.c.l.b16 %v352
        %v363 = vpack.c.b16 %v360, %v357
        %v364 = vpack.c.b16 %v361, %v358
        %v365 = vpack.c.b16 %v362, %v359
        %vm369 = vcmask 130048
        %v371 = vsel %vm369, %v348, 0
        %373 = vmatprep.subr.bf16.mxu0 0
        %374 = vmatpush1.bf16.msra.mxu0 0
        %375 = vmatprep.subr.bf16.mxu0 0
        %376 = vmatpush1.bf16.msra.mxu0 0
        %377 = vmatprep.subr.bf16.mxu0 0
        %378 = vmatpush1.bf16.msra.mxu0 0
        %379 = vmatprep.subr.bf16.mxu0 0
        %380 = vmatpush1.bf16.msra.mxu0 0
        %381 = vmatprep.subr.bf16.mxu0 0
        %382 = vmatpush1.bf16.msra.mxu0 0
        %383 = vmatprep.subr.bf16.mxu0 0
        %384 = vmatpush1.bf16.msra.mxu0 0
        %385 = vmatprep.subr.bf16.mxu0 0
        %386 = vmatpush1.bf16.msra.mxu0 0
        %387 = vmatprep.subr.bf16.mxu0 %v364
        %388 = vmatpush1.bf16.msra.mxu0 %v363
        %389 = vmatprep.subr.bf16.mxu0 0
        %390 = vmatpush2.bf16.msra.mxu0 0
        %391 = vmatprep.subr.bf16.mxu0 0
        %392 = vmatpush2.bf16.msra.mxu0 0
        %393 = vmatprep.subr.bf16.mxu0 0
        %394 = vmatpush2.bf16.msra.mxu0 0
        %395 = vmatprep.subr.bf16.mxu0 0
        %396 = vmatpush2.bf16.msra.mxu0 0
        %397 = vmatprep.subr.bf16.mxu0 0
        %398 = vmatpush2.bf16.msra.mxu0 0
        %399 = vmatprep.subr.bf16.mxu0 0
        %400 = vmatpush2.bf16.msra.mxu0 0
        %401 = vmatprep.subr.bf16.mxu0 0
        %402 = vmatpush2.bf16.msra.mxu0 0
        %403 = vmatprep.subr.bf16.mxu0 0
        %404 = vmatpush2.bf16.msra.mxu0 0
        %405 = vmatprep.mubr.bf16.mxu0 0
        %406 = vmatmul.mubr.bf16.gmra.mxu0 %v371
        %v407 = vpop.f32.mrf.mxu0
        %v408 = vadd.f32 0.0, %v407
        %v409 = vpop.f32.mrf.mxu0
        %v410 = vadd.f32 0.0, %v409
        %v411 = vpop.f32.mrf.mxu0
        %v412 = vpop.f32.mrf.mxu0
        %413 = vdwg.mxu0
        %414 = vmatprep.subr.bf16.mxu0 0
        %415 = vmatpush1.bf16.msra.mxu0 0
        %416 = vmatprep.subr.bf16.mxu0 0
        %417 = vmatpush1.bf16.msra.mxu0 0
        %418 = vmatprep.subr.bf16.mxu0 0
        %419 = vmatpush1.bf16.msra.mxu0 0
        %420 = vmatprep.subr.bf16.mxu0 0
        %421 = vmatpush1.bf16.msra.mxu0 0
        %422 = vmatprep.subr.bf16.mxu0 0
        %423 = vmatpush1.bf16.msra.mxu0 0
        %424 = vmatprep.subr.bf16.mxu0 0
        %425 = vmatpush1.bf16.msra.mxu0 0
        %426 = vmatprep.subr.bf16.mxu0 0
        %427 = vmatpush1.bf16.msra.mxu0 0
        %428 = vmatprep.subr.bf16.mxu0 0
        %429 = vmatpush1.bf16.msra.mxu0 %v365
        %430 = vmatprep.subr.bf16.mxu0 0
        %431 = vmatpush2.bf16.msra.mxu0 0
        %432 = vmatprep.subr.bf16.mxu0 0
        %433 = vmatpush2.bf16.msra.mxu0 0
        %434 = vmatprep.subr.bf16.mxu0 0
        %435 = vmatpush2.bf16.msra.mxu0 0
        %436 = vmatprep.subr.bf16.mxu0 0
        %437 = vmatpush2.bf16.msra.mxu0 0
        %438 = vmatprep.subr.bf16.mxu0 0
        %439 = vmatpush2.bf16.msra.mxu0 0
        %440 = vmatprep.subr.bf16.mxu0 0
        %441 = vmatpush2.bf16.msra.mxu0 0
        %442 = vmatprep.subr.bf16.mxu0 0
        %443 = vmatpush2.bf16.msra.mxu0 0
        %444 = vmatprep.subr.bf16.mxu0 0
        %445 = vmatpush2.bf16.msra.mxu0 0
        %446 = vmatprep.mubr.bf16.mxu0 0
        %447 = vmatmul.mubr.bf16.gmra.mxu0 %v371
        %v448 = vpop.f32.mrf.mxu0
        %v449 = vadd.f32 0.0, %v448
        %v450 = vpop.f32.mrf.mxu0
        %v451 = vpop.f32.mrf.mxu0
        %v452 = vpop.f32.mrf.mxu0
        %453 = vdwg.mxu0
        %v454 = vld [vmem:[#allocation3] sm:$0xf]
        %v455 = vld [vmem:[%s4] sm:$0xf]
        %v456 = vld [vmem:[%s4 + $0x4] sm:$0xf]
        %v457 = vld [vmem:[%s4 + $0x8] sm:$0xf]
        %v458 = vld [vmem:[%s4 + $0xc] sm:$0xf]
        %v463 = vunpack.c.l.b16 %v455
        %v464 = vunpack.c.l.b16 %v456
        %v465 = vunpack.c.l.b16 %v457
        %v466 = vunpack.c.l.b16 %v458
        %v467 = vpack.c.b16 %v464, %v463
        %v468 = vpack.c.b16 %v466, %v465
        %vm471 = vcmask 261120
        %v473 = vsel %vm471, %v454, 0
        %475 = vmatprep.subr.bf16.mxu0 0
        %476 = vmatpush1.bf16.msra.mxu0 0
        %477 = vmatprep.subr.bf16.mxu0 0
        %478 = vmatpush1.bf16.msra.mxu0 0
        %479 = vmatprep.subr.bf16.mxu0 0
        %480 = vmatpush1.bf16.msra.mxu0 0
        %481 = vmatprep.subr.bf16.mxu0 0
        %482 = vmatpush1.bf16.msra.mxu0 0
        %483 = vmatprep.subr.bf16.mxu0 0
        %484 = vmatpush1.bf16.msra.mxu0 0
        %485 = vmatprep.subr.bf16.mxu0 0
        %486 = vmatpush1.bf16.msra.mxu0 0
        %487 = vmatprep.subr.bf16.mxu0 0
        %488 = vmatpush1.bf16.msra.mxu0 %v468
        %489 = vmatprep.subr.bf16.mxu0 0
        %490 = vmatpush1.bf16.msra.mxu0 %v467
        %491 = vmatprep.subr.bf16.mxu0 0
        %492 = vmatpush2.bf16.msra.mxu0 0
        %493 = vmatprep.subr.bf16.mxu0 0
        %494 = vmatpush2.bf16.msra.mxu0 0
        %495 = vmatprep.subr.bf16.mxu0 0
        %496 = vmatpush2.bf16.msra.mxu0 0
        %497 = vmatprep.subr.bf16.mxu0 0
        %498 = vmatpush2.bf16.msra.mxu0 0
        %499 = vmatprep.subr.bf16.mxu0 0
        %500 = vmatpush2.bf16.msra.mxu0 0
        %501 = vmatprep.subr.bf16.mxu0 0
        %502 = vmatpush2.bf16.msra.mxu0 0
        %503 = vmatprep.subr.bf16.mxu0 0
        %504 = vmatpush2.bf16.msra.mxu0 0
        %505 = vmatprep.subr.bf16.mxu0 0
        %506 = vmatpush2.bf16.msra.mxu0 0
        %507 = vmatprep.mubr.bf16.mxu0 0
        %508 = vmatmul.mubr.bf16.gmra.mxu0 %v473
        %v509 = vpop.f32.mrf.mxu0
        %v510 = vadd.f32 0.0, %v509
        %v511 = vpop.f32.mrf.mxu0
        %v512 = vpop.f32.mrf.mxu0
        %v513 = vpop.f32.mrf.mxu0
        %514 = vdwg.mxu0
        %v515 = vadd.f32 %v408, %v510
        %v516 = vld [vmem:[%s6] sm:$0x1]
        %v518 = vlaneseq
        %v519 = vshrl.u32 %v518, 7
        %v520 = vsub.s32 0, %v519
        %v521 = vrot.slane %v516, %v520
        %v523 = vadd.f32 %v515, %v521
        %s524 = scalar_lea.vmem [#allocation3], 4
        %v525 = vld [vmem:[%s524] sm:$0xf]
        %s526 = scalar_lea.vmem %s4, 16
        %v527 = vld [vmem:[%s526] sm:$0xf]
        %v528 = vld [vmem:[%s526 + $0x4] sm:$0xf]
        %v529 = vld [vmem:[%s526 + $0x8] sm:$0xf]
        %v530 = vld [vmem:[%s526 + $0xc] sm:$0xf]
        %v535 = vunpack.c.l.b16 %v527
        %v536 = vunpack.c.l.b16 %v528
        %v537 = vunpack.c.l.b16 %v529
        %v538 = vunpack.c.l.b16 %v530
        %v539 = vpack.c.b16 %v536, %v535
        %v540 = vpack.c.b16 %v538, %v537
        %v544 = vsel %vm471, %v525, 0
        %546 = vmatprep.subr.bf16.mxu0 0
        %547 = vmatpush1.bf16.msra.mxu0 0
        %548 = vmatprep.subr.bf16.mxu0 0
        %549 = vmatpush1.bf16.msra.mxu0 0
        %550 = vmatprep.subr.bf16.mxu0 0
        %551 = vmatpush1.bf16.msra.mxu0 0
        %552 = vmatprep.subr.bf16.mxu0 0
        %553 = vmatpush1.bf16.msra.mxu0 0
        %554 = vmatprep.subr.bf16.mxu0 0
        %555 = vmatpush1.bf16.msra.mxu0 0
        %556 = vmatprep.subr.bf16.mxu0 0
        %557 = vmatpush1.bf16.msra.mxu0 0
        %558 = vmatprep.subr.bf16.mxu0 0
        %559 = vmatpush1.bf16.msra.mxu0 %v540
        %560 = vmatprep.subr.bf16.mxu0 0
        %561 = vmatpush1.bf16.msra.mxu0 %v539
        %562 = vmatprep.subr.bf16.mxu0 0
        %563 = vmatpush2.bf16.msra.mxu0 0
        %564 = vmatprep.subr.bf16.mxu0 0
        %565 = vmatpush2.bf16.msra.mxu0 0
        %566 = vmatprep.subr.bf16.mxu0 0
        %567 = vmatpush2.bf16.msra.mxu0 0
        %568 = vmatprep.subr.bf16.mxu0 0
        %569 = vmatpush2.bf16.msra.mxu0 0
        %570 = vmatprep.subr.bf16.mxu0 0
        %571 = vmatpush2.bf16.msra.mxu0 0
        %572 = vmatprep.subr.bf16.mxu0 0
        %573 = vmatpush2.bf16.msra.mxu0 0
        %574 = vmatprep.subr.bf16.mxu0 0
        %575 = vmatpush2.bf16.msra.mxu0 0
        %576 = vmatprep.subr.bf16.mxu0 0
        %577 = vmatpush2.bf16.msra.mxu0 0
        %578 = vmatprep.mubr.bf16.mxu0 0
        %579 = vmatmul.mubr.bf16.gmra.mxu0 %v544
        %v580 = vpop.f32.mrf.mxu0
        %v581 = vadd.f32 0.0, %v580
        %v582 = vpop.f32.mrf.mxu0
        %v583 = vpop.f32.mrf.mxu0
        %v584 = vpop.f32.mrf.mxu0
        %585 = vdwg.mxu0
        %v586 = vadd.f32 %v410, %v581
        %s587 = scalar_lea.vmem %s6, 1
        %v588 = vld [vmem:[%s587] sm:$0x1]
        %v590 = vlaneseq
        %v591 = vshrl.u32 %v590, 7
        %v592 = vsub.s32 0, %v591
        %v593 = vrot.slane %v588, %v592
        %v595 = vadd.f32 %v586, %v593
        %s596 = scalar_lea.vmem [#allocation3], 8
        %v597 = vld [vmem:[%s596] sm:$0xf]
        %s598 = scalar_lea.vmem %s4, 32
        %v599 = vld [vmem:[%s598] sm:$0xf]
        %v600 = vld [vmem:[%s598 + $0x4] sm:$0xf]
        %v601 = vld [vmem:[%s598 + $0x8] sm:$0xf]
        %v602 = vld [vmem:[%s598 + $0xc] sm:$0xf]
        %v607 = vunpack.c.l.b16 %v599
        %v608 = vunpack.c.l.b16 %v600
        %v609 = vunpack.c.l.b16 %v601
        %v610 = vunpack.c.l.b16 %v602
        %v611 = vpack.c.b16 %v608, %v607
        %v612 = vpack.c.b16 %v610, %v609
        %v616 = vsel %vm471, %v597, 0
        %618 = vmatprep.subr.bf16.mxu0 0
        %619 = vmatpush1.bf16.msra.mxu0 0
        %620 = vmatprep.subr.bf16.mxu0 0
        %621 = vmatpush1.bf16.msra.mxu0 0
        %622 = vmatprep.subr.bf16.mxu0 0
        %623 = vmatpush1.bf16.msra.mxu0 0
        %624 = vmatprep.subr.bf16.mxu0 0
        %625 = vmatpush1.bf16.msra.mxu0 0
        %626 = vmatprep.subr.bf16.mxu0 0
        %627 = vmatpush1.bf16.msra.mxu0 0
        %628 = vmatprep.subr.bf16.mxu0 0
        %629 = vmatpush1.bf16.msra.mxu0 0
        %630 = vmatprep.subr.bf16.mxu0 0
        %631 = vmatpush1.bf16.msra.mxu0 %v612
        %632 = vmatprep.subr.bf16.mxu0 0
        %633 = vmatpush1.bf16.msra.mxu0 %v611
        %634 = vmatprep.subr.bf16.mxu0 0
        %635 = vmatpush2.bf16.msra.mxu0 0
        %636 = vmatprep.subr.bf16.mxu0 0
        %637 = vmatpush2.bf16.msra.mxu0 0
        %638 = vmatprep.subr.bf16.mxu0 0
        %639 = vmatpush2.bf16.msra.mxu0 0
        %640 = vmatprep.subr.bf16.mxu0 0
        %641 = vmatpush2.bf16.msra.mxu0 0
        %642 = vmatprep.subr.bf16.mxu0 0
        %643 = vmatpush2.bf16.msra.mxu0 0
        %644 = vmatprep.subr.bf16.mxu0 0
        %645 = vmatpush2.bf16.msra.mxu0 0
        %646 = vmatprep.subr.bf16.mxu0 0
        %647 = vmatpush2.bf16.msra.mxu0 0
        %648 = vmatprep.subr.bf16.mxu0 0
        %649 = vmatpush2.bf16.msra.mxu0 0
        %650 = vmatprep.mubr.bf16.mxu0 0
        %651 = vmatmul.mubr.bf16.gmra.mxu0 %v616
        %v652 = vpop.f32.mrf.mxu0
        %v653 = vadd.f32 0.0, %v652
        %v654 = vpop.f32.mrf.mxu0
        %v655 = vpop.f32.mrf.mxu0
        %v656 = vpop.f32.mrf.mxu0
        %657 = vdwg.mxu0
        %v658 = vadd.f32 %v449, %v653
        %s659 = scalar_lea.vmem %s6, 2
        %v660 = vld [vmem:[%s659] sm:$0x1]
        %v662 = vlaneseq
        %v663 = vshrl.u32 %v662, 7
        %v664 = vsub.s32 0, %v663
        %v665 = vrot.slane %v660, %v664
        %v667 = vadd.f32 %v658, %v665
        %v668 = vlaneseq
        %v669 = vand.u32 %v668, 127
        %vm670 = vcmp.lt.s32.totalorder %v669, 96
        %v671 = vld [vmem:[%s5] sm:$0xf]
        %v672 = vld [vmem:[%s5 + $0x4] sm:$0xf]
        %v673 = vld [vmem:[%s5 + $0x8] sm:$0xf]
        %v674 = vld [vmem:[%s5 + $0xc] sm:$0xf]
        %v679 = vunpack.c.l.b16 %v671
        %v680 = vunpack.c.l.b16 %v672
        %v681 = vunpack.c.l.b16 %v673
        %v682 = vunpack.c.l.b16 %v674
        %v683 = vpack.c.b16 %v680, %v679
        %v684 = vpack.c.b16 %v682, %v681
        %687 = vmatprep.subr.bf16.mxu0 0
        %688 = vmatpush1.bf16.msra.mxu0 0
        %689 = vmatprep.subr.bf16.mxu0 0
        %690 = vmatpush1.bf16.msra.mxu0 0
        %691 = vmatprep.subr.bf16.mxu0 0
        %692 = vmatpush1.bf16.msra.mxu0 0
        %693 = vmatprep.subr.bf16.mxu0 0
        %694 = vmatpush1.bf16.msra.mxu0 0
        %695 = vmatprep.subr.bf16.mxu0 0
        %696 = vmatpush1.bf16.msra.mxu0 0
        %697 = vmatprep.subr.bf16.mxu0 0
        %698 = vmatpush1.bf16.msra.mxu0 0
        %699 = vmatprep.subr.bf16.mxu0 0
        %700 = vmatpush1.bf16.msra.mxu0 %v684
        %701 = vmatprep.subr.bf16.mxu0 0
        %702 = vmatpush1.bf16.msra.mxu0 %v683
        %703 = vmatprep.subr.bf16.mxu0 0
        %704 = vmatpush2.bf16.msra.mxu0 0
        %705 = vmatprep.subr.bf16.mxu0 0
        %706 = vmatpush2.bf16.msra.mxu0 0
        %707 = vmatprep.subr.bf16.mxu0 0
        %708 = vmatpush2.bf16.msra.mxu0 0
        %709 = vmatprep.subr.bf16.mxu0 0
        %710 = vmatpush2.bf16.msra.mxu0 0
        %711 = vmatprep.subr.bf16.mxu0 0
        %712 = vmatpush2.bf16.msra.mxu0 0
        %713 = vmatprep.subr.bf16.mxu0 0
        %714 = vmatpush2.bf16.msra.mxu0 0
        %715 = vmatprep.subr.bf16.mxu0 0
        %716 = vmatpush2.bf16.msra.mxu0 0
        %717 = vmatprep.subr.bf16.mxu0 0
        %718 = vmatpush2.bf16.msra.mxu0 0
        %719 = vmatprep.mubr.bf16.mxu0 0
        %720 = vmatmul.mubr.bf16.gmra.mxu0 %v616
        %v721 = vpop.f32.mrf.mxu0
        %v722 = vadd.f32 0.0, %v721
        %v723 = vpop.f32.mrf.mxu0
        %v724 = vpop.f32.mrf.mxu0
        %v725 = vpop.f32.mrf.mxu0
        %726 = vdwg.mxu0
        %v727 = vadd.f32 %v523, %v722
        %v728 = vmul.f32 %v727, 0.5
        %v729 = vsel %vm670, %v728, %v727
        %v730 = vtanh.pop %v729
        %v731 = vmul.f32 %v730, 0.5
        %v732 = vadd.f32 %v731, 0.5
        %v733 = vsel %vm670, %v732, %v730
        %v734 = vld [vmem:[#allocation2] sm:$0xff]
        %v735 = vmul.f32 %v733, %v734
        %737 = vrot.lane.b32.xlu0 %v733, 64
        %v738 = vpop.permute.xlu0 %737
        %v740 = vmul.f32 %v733, %v738
        %742 = vrot.lane.b32.xlu0 %v740, 96
        %v743 = vpop.permute.xlu0 %742
        %v745 = vadd.f32 %v735, %v743
        %v746 = vtanh.pop %v745
        %748 = vrot.lane.b32.xlu0 %v746, 64
        %v749 = vpop.permute.xlu0 %748
        %v751 = vmul.f32 %v733, %v749
        %752 = vst.msk [vmem:[#allocation2] sm:$0xff] %vm471, %v745
        %v753 = vpack.c.bf16 %v751, %v751
        %v755 = vunpack.c.l.b16 %v753
        %v756 = vpack.c.b16 %v755, %v755
        %757 = vrot.lane.b32.xlu0 %v756, 64
        %v758 = vpop.permute.xlu0 %757
        %vm760 = vcmask 257024
        %761 = vst.msk [vmem:[#allocation3] sm:$0xf] %vm760, %v758
        %s762 = scalar_lea.vmem %s5, 16
        %v763 = vld [vmem:[%s762] sm:$0xf]
        %v764 = vld [vmem:[%s762 + $0x4] sm:$0xf]
        %v765 = vld [vmem:[%s762 + $0x8] sm:$0xf]
        %v766 = vld [vmem:[%s762 + $0xc] sm:$0xf]
        %767 = vrot.lane.b32.xlu0 %v753, 64
        %v768 = vpop.permute.xlu0 %767
        %v773 = vunpack.c.l.b16 %v763
        %v774 = vunpack.c.l.b16 %v764
        %v775 = vunpack.c.l.b16 %v765
        %v776 = vunpack.c.l.b16 %v766
        %v777 = vpack.c.b16 %v774, %v773
        %v778 = vpack.c.b16 %v776, %v775
        %v782 = vsel %vm471, %v768, 0
        %784 = vmatprep.subr.bf16.mxu0 0
        %785 = vmatpush1.bf16.msra.mxu0 0
        %786 = vmatprep.subr.bf16.mxu0 0
        %787 = vmatpush1.bf16.msra.mxu0 0
        %788 = vmatprep.subr.bf16.mxu0 0
        %789 = vmatpush1.bf16.msra.mxu0 0
        %790 = vmatprep.subr.bf16.mxu0 0
        %791 = vmatpush1.bf16.msra.mxu0 0
        %792 = vmatprep.subr.bf16.mxu0 0
        %793 = vmatpush1.bf16.msra.mxu0 0
        %794 = vmatprep.subr.bf16.mxu0 0
        %795 = vmatpush1.bf16.msra.mxu0 0
        %796 = vmatprep.subr.bf16.mxu0 0
        %797 = vmatpush1.bf16.msra.mxu0 %v778
        %798 = vmatprep.subr.bf16.mxu0 0
        %799 = vmatpush1.bf16.msra.mxu0 %v777
        %800 = vmatprep.subr.bf16.mxu0 0
        %801 = vmatpush2.bf16.msra.mxu0 0
        %802 = vmatprep.subr.bf16.mxu0 0
        %803 = vmatpush2.bf16.msra.mxu0 0
        %804 = vmatprep.subr.bf16.mxu0 0
        %805 = vmatpush2.bf16.msra.mxu0 0
        %806 = vmatprep.subr.bf16.mxu0 0
        %807 = vmatpush2.bf16.msra.mxu0 0
        %808 = vmatprep.subr.bf16.mxu0 0
        %809 = vmatpush2.bf16.msra.mxu0 0
        %810 = vmatprep.subr.bf16.mxu0 0
        %811 = vmatpush2.bf16.msra.mxu0 0
        %812 = vmatprep.subr.bf16.mxu0 0
        %813 = vmatpush2.bf16.msra.mxu0 0
        %814 = vmatprep.subr.bf16.mxu0 0
        %815 = vmatpush2.bf16.msra.mxu0 0
        %816 = vmatprep.mubr.bf16.mxu0 0
        %817 = vmatmul.mubr.bf16.gmra.mxu0 %v782
        %v818 = vpop.f32.mrf.mxu0
        %v819 = vadd.f32 0.0, %v818
        %v820 = vpop.f32.mrf.mxu0
        %v821 = vpop.f32.mrf.mxu0
        %v822 = vpop.f32.mrf.mxu0
        %823 = vdwg.mxu0
        %v824 = vadd.f32 %v595, %v819
        %v825 = vmul.f32 %v824, 0.5
        %v826 = vsel %vm670, %v825, %v824
        %v827 = vtanh.pop %v826
        %v828 = vmul.f32 %v827, 0.5
        %v829 = vadd.f32 %v828, 0.5
        %v830 = vsel %vm670, %v829, %v827
        %s831 = scalar_lea.vmem [#allocation2], 8
        %v832 = vld [vmem:[%s831] sm:$0xff]
        %v833 = vmul.f32 %v830, %v832
        %835 = vrot.lane.b32.xlu0 %v830, 64
        %v836 = vpop.permute.xlu0 %835
        %v838 = vmul.f32 %v830, %v836
        %840 = vrot.lane.b32.xlu0 %v838, 96
        %v841 = vpop.permute.xlu0 %840
        %v843 = vadd.f32 %v833, %v841
        %v844 = vtanh.pop %v843
        %846 = vrot.lane.b32.xlu0 %v844, 64
        %v847 = vpop.permute.xlu0 %846
        %v849 = vmul.f32 %v830, %v847
        %850 = vst.msk [vmem:[%s831] sm:$0xff] %vm471, %v843
        %v851 = vpack.c.bf16 %v849, %v849
        %v853 = vunpack.c.l.b16 %v851
        %v854 = vpack.c.b16 %v853, %v853
        %855 = vrot.lane.b32.xlu0 %v854, 64
        %v856 = vpop.permute.xlu0 %855
        %858 = vst.msk [vmem:[%s524] sm:$0xf] %vm760, %v856
        %s859 = scalar_lea.vmem %s5, 32
        %v860 = vld [vmem:[%s859] sm:$0xf]
        %v861 = vld [vmem:[%s859 + $0x4] sm:$0xf]
        %v862 = vld [vmem:[%s859 + $0x8] sm:$0xf]
        %v863 = vld [vmem:[%s859 + $0xc] sm:$0xf]
        %864 = vrot.lane.b32.xlu0 %v851, 64
        %v865 = vpop.permute.xlu0 %864
        %v870 = vunpack.c.l.b16 %v860
        %v871 = vunpack.c.l.b16 %v861
        %v872 = vunpack.c.l.b16 %v862
        %v873 = vunpack.c.l.b16 %v863
        %v874 = vpack.c.b16 %v871, %v870
        %v875 = vpack.c.b16 %v873, %v872
        %v879 = vsel %vm471, %v865, 0
        %881 = vmatprep.subr.bf16.mxu0 0
        %882 = vmatpush1.bf16.msra.mxu0 0
        %883 = vmatprep.subr.bf16.mxu0 0
        %884 = vmatpush1.bf16.msra.mxu0 0
        %885 = vmatprep.subr.bf16.mxu0 0
        %886 = vmatpush1.bf16.msra.mxu0 0
        %887 = vmatprep.subr.bf16.mxu0 0
        %888 = vmatpush1.bf16.msra.mxu0 0
        %889 = vmatprep.subr.bf16.mxu0 0
        %890 = vmatpush1.bf16.msra.mxu0 0
        %891 = vmatprep.subr.bf16.mxu0 0
        %892 = vmatpush1.bf16.msra.mxu0 0
        %893 = vmatprep.subr.bf16.mxu0 0
        %894 = vmatpush1.bf16.msra.mxu0 %v875
        %895 = vmatprep.subr.bf16.mxu0 0
        %896 = vmatpush1.bf16.msra.mxu0 %v874
        %897 = vmatprep.subr.bf16.mxu0 0
        %898 = vmatpush2.bf16.msra.mxu0 0
        %899 = vmatprep.subr.bf16.mxu0 0
        %900 = vmatpush2.bf16.msra.mxu0 0
        %901 = vmatprep.subr.bf16.mxu0 0
        %902 = vmatpush2.bf16.msra.mxu0 0
        %903 = vmatprep.subr.bf16.mxu0 0
        %904 = vmatpush2.bf16.msra.mxu0 0
        %905 = vmatprep.subr.bf16.mxu0 0
        %906 = vmatpush2.bf16.msra.mxu0 0
        %907 = vmatprep.subr.bf16.mxu0 0
        %908 = vmatpush2.bf16.msra.mxu0 0
        %909 = vmatprep.subr.bf16.mxu0 0
        %910 = vmatpush2.bf16.msra.mxu0 0
        %911 = vmatprep.subr.bf16.mxu0 0
        %912 = vmatpush2.bf16.msra.mxu0 0
        %913 = vmatprep.mubr.bf16.mxu0 0
        %914 = vmatmul.mubr.bf16.gmra.mxu0 %v879
        %v915 = vpop.f32.mrf.mxu0
        %v916 = vadd.f32 0.0, %v915
        %v917 = vpop.f32.mrf.mxu0
        %v918 = vpop.f32.mrf.mxu0
        %v919 = vpop.f32.mrf.mxu0
        %920 = vdwg.mxu0
        %v921 = vadd.f32 %v667, %v916
        %v922 = vmul.f32 %v921, 0.5
        %v923 = vsel %vm670, %v922, %v921
        %v924 = vtanh.pop %v923
        %v925 = vmul.f32 %v924, 0.5
        %v926 = vadd.f32 %v925, 0.5
        %v927 = vsel %vm670, %v926, %v924
        %s928 = scalar_lea.vmem [#allocation2], 16
        %v929 = vld [vmem:[%s928] sm:$0xff]
        %v930 = vmul.f32 %v927, %v929
        %932 = vrot.lane.b32.xlu0 %v927, 64
        %v933 = vpop.permute.xlu0 %932
        %v935 = vmul.f32 %v927, %v933
        %937 = vrot.lane.b32.xlu0 %v935, 96
        %v938 = vpop.permute.xlu0 %937
        %v940 = vadd.f32 %v930, %v938
        %v941 = vtanh.pop %v940
        %943 = vrot.lane.b32.xlu0 %v941, 64
        %v944 = vpop.permute.xlu0 %943
        %v946 = vmul.f32 %v927, %v944
        %947 = vst.msk [vmem:[%s928] sm:$0xff] %vm471, %v940
        %v948 = vpack.c.bf16 %v946, %v946
        %v950 = vunpack.c.l.b16 %v948
        %v951 = vpack.c.b16 %v950, %v950
        %952 = vrot.lane.b32.xlu0 %v951, 64
        %v953 = vpop.permute.xlu0 %952
        %955 = vst.msk [vmem:[%s596] sm:$0xf] %vm760, %v953
        %957 = vrot.lane.b32.xlu0 %v751, 64
        %v958 = vpop.permute.xlu0 %957
        %961 = vrot.lane.b32.xlu0 %v849, 96
        %v962 = vpop.permute.xlu0 %961
        %v964 = vsel %vm471, %v958, %v962
        %vm965 = vcmask 523264
        %v966 = vsel %vm965, %v964, %v946
        %vm967 = vcmask 785408
        %968 = vst.msk [vmem:[%s328] sm:$0xff] %vm967, %v966
        %p969 = scmp.eq.s32.totalorder %s22, 7
        // Predicated region
        $region61: #{multilayer_lstm_forward_seq.1} parent=47 // pred_check
          %p970 = pneg %p969
        $region62: #{multilayer_lstm_forward_seq.1} parent=47 // pred_check_branch
          %972 = sbr.rel (%p970) target = $region64
        $region63: #{multilayer_lstm_forward_seq.1} parent=47 // pred_region
          %974 = vrot.lane.b32.xlu0 %v843, 32
          %v975 = vpop.permute.xlu0 %974
          %978 = vrot.lane.b32.xlu0 %v940, 64
          %v979 = vpop.permute.xlu0 %978
          %v981 = vsel %vm471, %v745, %v975
          %v982 = vsel %vm965, %v981, %v979
          %983 = vst.msk [vmem:[%s8] sm:$0xff] %vm967, %v982
        $region64: #{multilayer_lstm_forward_seq.1} parent=47 // pred_fallthru
          _
        %p984 = scmp.lt.s32.totalorder %s22, 7
        %s985 = scalar_select %p984, %s22, 7
        %s986 = smul.addr %s985, 8
        %s987 = scalar_lea.vmem %s7, %s986
        // Predicated region
        $region65: #{multilayer_lstm_forward_seq.1} parent=47 // pred_check
          %p988 = pneg %p192
        $region66: #{multilayer_lstm_forward_seq.1} parent=47 // pred_check_branch
          %990 = sbr.rel (%p988) target = $region68
        $region67: #{multilayer_lstm_forward_seq.1} parent=47 // pred_region
          _
        $region68: #{multilayer_lstm_forward_seq.1} parent=47 // pred_fallthru
          _
        // Predicated region
        $region69: #{multilayer_lstm_forward_seq.1} parent=47 // pred_check
          %p991 = pneg %p213
        $region70: #{multilayer_lstm_forward_seq.1} parent=47 // pred_check_branch
          %993 = sbr.rel (%p991) target = $region72
        $region71: #{multilayer_lstm_forward_seq.1} parent=47 // pred_region
          _
        $region72: #{multilayer_lstm_forward_seq.1} parent=47 // pred_fallthru
          _
        // Predicated region
        $region73: #{multilayer_lstm_forward_seq.1} parent=47 // pred_check
          %p994 = pneg %p213
        $region74: #{multilayer_lstm_forward_seq.1} parent=47 // pred_check_branch
          %996 = sbr.rel (%p994) target = $region76
        $region75: #{multilayer_lstm_forward_seq.1} parent=47 // pred_region
          _
        $region76: #{multilayer_lstm_forward_seq.1} parent=47 // pred_fallthru
          _
      $region48: #{multilayer_lstm_forward_seq.1} parent=5 // pred_fallthru
        _
      %p997 = scmp.le.s32.totalorder 2, %s17
      // Predicated region
      $region77: #{multilayer_lstm_forward_seq.1} parent=5 // pred_check
        %p998 = pneg %p997
      $region78: #{multilayer_lstm_forward_seq.1} parent=5 // pred_check_branch
        %1000 = sbr.rel (%p998) target = $region80
      $region79: #{multilayer_lstm_forward_seq.1} parent=5 // pred_region
        %s1001 = ssub.s32 %s17, 2
        // Predicated region
        $region81: #{multilayer_lstm_forward_seq.1} parent=79 // pred_check
          %p1002 = pneg %p198
        $region82: #{multilayer_lstm_forward_seq.1} parent=79 // pred_check_branch
          %1004 = sbr.rel (%p1002) target = $region84
        $region83: #{multilayer_lstm_forward_seq.1} parent=79 // pred_region
          %p1005 = scmp.lt.s32.totalorder %s23, 7
          %s1006 = scalar_select %p1005, %s23, 7
          %s1007 = smul.addr %s1006, 8
          %s1008 = scalar_lea.vmem %s7, %s1007
        $region84: #{multilayer_lstm_forward_seq.1} parent=79 // pred_fallthru
          _
      $region80: #{multilayer_lstm_forward_seq.1} parent=5 // pred_fallthru
        _
    $region6: #{multilayer_lstm_forward_seq.1} parent=1 // loop_footer
      %s21 = sadd.s32 1, %s17
    $region7: #{multilayer_lstm_forward_seq.1} parent=1 // loop_footer_branch
      %16 = sbr.rel target = $region3
    $region8: #{multilayer_lstm_forward_seq.1} parent=1 // loop_exit
      _
    %1009 = vsyncpa [#allocation5], 1
    %s1010 = scalar_lea.sflag [#allocation5], 1
    %1011 = vsyncpa %s1010, 1
    %1012 = vsyncpa [#allocation7], 1

</llo_original>
